<compile_context>
chip_gen: v5e
topology: v5e:2x2
jax: 0.10.0
libtpu: 0.0.40
codegen_flags: <defaults>
</compile_context>

<pallas_src>
import jax
import jax.numpy as jnp
from jax.experimental import pallas as pl
from jax.experimental.pallas import tpu as pltpu


def _gcn_fused_kernel(obj0_ref, pred0_ref, s_oh_ref, o_oh_ref,
                      s_oht_ref, o_oht_ref, invc_ref,
                      w1a_ref, w1b_ref, w1c_ref, b1_ref,
                      w2_ref, b2_ref, w3_ref, b3_ref, w4_ref, b4_ref,
                      obj_out_ref, pred_out_ref):
    """One grid step == one GraphConv layer; grid = (num_layers,)."""
    l = pl.program_id(0)
    H = b1_ref.shape[-1]
    Dout = b4_ref.shape[-1]
    bf16 = jnp.bfloat16
    f32 = jnp.float32

    # Layer 0: seed the carried activations.  The output BlockSpecs return a
    # constant block index, so these buffers live in VMEM across the whole
    # layer grid and are only written back to HBM after the last layer.
    @pl.when(l == 0)
    def _():
        obj_out_ref[...] = obj0_ref[...]
        pred_out_ref[...] = pred0_ref[...]

    obj = obj_out_ref[...]          # (O, Din)  f32, result of layer l-1
    pred = pred_out_ref[...]        # (T, Din)  f32

    # obj_vecs[s_idx] / obj_vecs[o_idx] as one-hot matmuls (bit-exact gather).
    s_vecs = jnp.dot(s_oh_ref[...], obj, preferred_element_type=f32)   # (T, Din)
    o_vecs = jnp.dot(o_oh_ref[...], obj, preferred_element_type=f32)   # (T, Din)

    # net1 = Linear(3*Din, H) -> ReLU -> Linear(H, 2H+Dout) -> ReLU.
    # W1 is pre-split into 3 row blocks: no (T, 3*Din) lane-axis concat copy.
    h1 = (jnp.dot(s_vecs.astype(bf16), w1a_ref[...], preferred_element_type=f32)
          + jnp.dot(pred.astype(bf16), w1b_ref[...], preferred_element_type=f32)
          + jnp.dot(o_vecs.astype(bf16), w1c_ref[...], preferred_element_type=f32)
          + b1_ref[...])
    h1 = jnp.maximum(h1, 0.0)
    t2 = jnp.maximum(
        jnp.dot(h1.astype(bf16), w2_ref[...], preferred_element_type=f32)
        + b2_ref[...], 0.0)                                             # (T, 2H+Dout)

    new_s = t2[:, :H]
    new_p = t2[:, H:H + Dout]
    new_o = t2[:, H + Dout:2 * H + Dout]

    # scatter_add over s_idx / o_idx via the pre-transposed one-hots, then
    # 'avg' pooling with the precomputed 1 / clamp(count, 1).
    pooled = (jnp.dot(s_oht_ref[...], new_s, preferred_element_type=f32)
              + jnp.dot(o_oht_ref[...], new_o, preferred_element_type=f32))  # (O, H)
    pooled = pooled * invc_ref[...]

    # net2 = Linear(H, H) -> ReLU -> Linear(H, Dout) -> ReLU.
    h3 = jnp.maximum(
        jnp.dot(pooled.astype(bf16), w3_ref[...], preferred_element_type=f32)
        + b3_ref[...], 0.0)
    out = jnp.maximum(
        jnp.dot(h3.astype(bf16), w4_ref[...], preferred_element_type=f32)
        + b4_ref[...], 0.0)

    obj_out_ref[...] = out          # carried into layer l+1
    pred_out_ref[...] = new_p


def graph_conv_net(objs, preds, edges, params):
    """Full GraphConvNet forward: embedding lookup + fused L-layer GCN kernel."""
    # Embedding lookups are parameter-setup glue; done in plain JAX.
    obj_vecs = params["obj_emb"][objs].astype(jnp.float32)     # (O, Din)
    pred_vecs = params["pred_emb"][preds].astype(jnp.float32)  # (T, Din)
    s_idx = edges[:, 0].astype(jnp.int32)                      # (T,)
    o_idx = edges[:, 1].astype(jnp.int32)                      # (T,)

    O, Din = obj_vecs.shape
    T = pred_vecs.shape[0]
    layers = params["layers"]
    L = len(layers)
    H = layers[0]["w1"].shape[1]
    Dout = layers[0]["w4"].shape[1]
    assert Din == Dout, "stacking the layers requires output_dim == input_dim"

    # ---- edge-structure tensors: identical for every layer, built once ------
    col = jnp.arange(O, dtype=jnp.int32)[None, :]              # (1, O)
    s_oh = (col == s_idx[:, None]).astype(jnp.float32)         # (T, O) gather one-hot
    o_oh = (col == o_idx[:, None]).astype(jnp.float32)         # (T, O)
    row = jnp.arange(O, dtype=jnp.int32)[:, None]              # (O, 1)
    s_oht = (row == s_idx[None, :]).astype(jnp.float32)        # (O, T) scatter one-hot
    o_oht = (row == o_idx[None, :]).astype(jnp.float32)        # (O, T)
    counts = s_oht.sum(axis=1, keepdims=True) + o_oht.sum(axis=1, keepdims=True)
    inv_counts = 1.0 / jnp.maximum(counts, 1.0)                # (O, 1)

    # ---- stack per-layer params into [L, ...]; weights bf16, biases f32 -----
    def stack(name, dtype):
        return jnp.stack([lyr[name] for lyr in layers], axis=0).astype(dtype)

    w1 = stack("w1", jnp.bfloat16)                             # (L, 3*Din, H)
    w1a, w1b, w1c = w1[:, :Din], w1[:, Din:2 * Din], w1[:, 2 * Din:]
    b1 = stack("b1", jnp.float32)                              # (L, 1, H)
    w2 = stack("w2", jnp.bfloat16)                             # (L, H, 2H+Dout)
    b2 = stack("b2", jnp.float32)
    w3 = stack("w3", jnp.bfloat16)                             # (L, H, H)
    b3 = stack("b3", jnp.float32)
    w4 = stack("w4", jnp.bfloat16)                             # (L, H, Dout)
    b4 = stack("b4", jnp.float32)

    def const_spec(shape):
        # Graph-constant operand: same block every layer -> DMA'd once.
        return pl.BlockSpec(shape, lambda l: (0,) * len(shape))

    def layer_spec(d0, d1):
        # Per-layer operand: leading L axis squeezed, block index follows l.
        return pl.BlockSpec((None, d0, d1), lambda l: (l, 0, 0))

    grid_spec = pltpu.PrefetchScalarGridSpec(
        num_scalar_prefetch=0,
        grid=(L,),
        in_specs=[
            const_spec((O, Din)),            # obj0
            const_spec((T, Din)),            # pred0
            const_spec((T, O)),              # s_oh
            const_spec((T, O)),              # o_oh
            const_spec((O, T)),              # s_oht
            const_spec((O, T)),              # o_oht
            const_spec((O, 1)),              # inv_counts
            layer_spec(Din, H),              # w1a
            layer_spec(Din, H),              # w1b
            layer_spec(Din, H),              # w1c
            layer_spec(1, H),                # b1
            layer_spec(H, 2 * H + Dout),     # w2
            layer_spec(1, 2 * H + Dout),     # b2
            layer_spec(H, H),                # w3
            layer_spec(1, H),                # b3
            layer_spec(H, Dout),             # w4
            layer_spec(1, Dout),             # b4
        ],
        out_specs=(
            pl.BlockSpec((O, Dout), lambda l: (0, 0)),
            pl.BlockSpec((T, Dout), lambda l: (0, 0)),
        ),
    )

    obj_out, _pred_out = pl.pallas_call(
        _gcn_fused_kernel,
        out_shape=(jax.ShapeDtypeStruct((O, Dout), jnp.float32),
                   jax.ShapeDtypeStruct((T, Dout), jnp.float32)),
        grid_spec=grid_spec,
        compiler_params=pltpu.CompilerParams(
            dimension_semantics=("arbitrary",),   # layers are sequential (carried)
        ),
    )(obj_vecs, pred_vecs, s_oh, o_oh, s_oht, o_oht, inv_counts,
      w1a, w1b, w1c, b1, w2, b2, w3, b3, w4, b4)
    return obj_out


def _reference_forward(objs, preds, edges, params):
    """Plain-JAX forward emulating the kernel's dtype choices (bf16 matmul
    inputs, f32 accumulation; exact gather/scatter)."""
    bf16, f32 = jnp.bfloat16, jnp.float32
    obj = params["obj_emb"][objs].astype(f32)
    pred = params["pred_emb"][preds].astype(f32)
    s_idx = edges[:, 0]
    o_idx = edges[:, 1]
    O, Din = obj.shape
    for p in params["layers"]:
        H = p["w1"].shape[1]
        Dout = p["w4"].shape[1]
        w1 = p["w1"].astype(bf16)
        s_v, o_v = obj[s_idx], obj[o_idx]
        h1 = (jnp.dot(s_v.astype(bf16), w1[:Din], preferred_element_type=f32)
              + jnp.dot(pred.astype(bf16), w1[Din:2 * Din], preferred_element_type=f32)
              + jnp.dot(o_v.astype(bf16), w1[2 * Din:], preferred_element_type=f32)
              + p["b1"])
        h1 = jnp.maximum(h1, 0.0)
        t2 = jnp.maximum(
            jnp.dot(h1.astype(bf16), p["w2"].astype(bf16), preferred_element_type=f32)
            + p["b2"], 0.0)
        new_s = t2[:, :H]
        new_p = t2[:, H:H + Dout]
        new_o = t2[:, H + Dout:2 * H + Dout]
        pooled = jnp.zeros((O, H), f32).at[s_idx].add(new_s).at[o_idx].add(new_o)
        counts = jnp.zeros((O,), f32).at[s_idx].add(1.0).at[o_idx].add(1.0)
        pooled = pooled * (1.0 / jnp.maximum(counts, 1.0))[:, None]
        h3 = jnp.maximum(
            jnp.dot(pooled.astype(bf16), p["w3"].astype(bf16), preferred_element_type=f32)
            + p["b3"], 0.0)
        obj = jnp.maximum(
            jnp.dot(h3.astype(bf16), p["w4"].astype(bf16), preferred_element_type=f32)
            + p["b4"], 0.0)
        pred = new_p
    return obj


def _init_linear(key, fan_in, fan_out):
    # PyTorch nn.Linear default init: U(-1/sqrt(fan_in), 1/sqrt(fan_in)).
    kw, kb = jax.random.split(key)
    bound = 1.0 / float(fan_in) ** 0.5
    w = jax.random.uniform(kw, (fan_in, fan_out), jnp.float32, -bound, bound)
    b = jax.random.uniform(kb, (1, fan_out), jnp.float32, -bound, bound)
    return w, b


if __name__ == "__main__":
    INPUT_DIM = 128     # == nn.Embedding(185, 128) feature dim
    HIDDEN_DIM = 128
    OUTPUT_DIM = 128    # == INPUT_DIM so the 5 layers stack, as in the module
    NUM_LAYERS = 5
    O, T = 16, 32       # number of objects / edges (triples)
    # TODO(synk): at real scene-graph scale (O, T >> 128) replace the dense
    # one-hot gather/scatter (quadratic VMEM; hits v7x's 64 MiB first) with a
    # take/DMA gather + tiled edge grid, and batch graphs so matmul M >= 128.

    key = jax.random.PRNGKey(0)
    k_oe, k_pe, k_layers, k_objs, k_preds, k_edges = jax.random.split(key, 6)

    params = {
        "obj_emb": jax.random.normal(k_oe, (185, 128), jnp.float32),
        "pred_emb": jax.random.normal(k_pe, (11, 128), jnp.float32),
        "layers": [],
    }
    for lk in jax.random.split(k_layers, NUM_LAYERS):
        k1, k2, k3, k4 = jax.random.split(lk, 4)
        w1, b1 = _init_linear(k1, 3 * INPUT_DIM, HIDDEN_DIM)
        w2, b2 = _init_linear(k2, HIDDEN_DIM, 2 * HIDDEN_DIM + OUTPUT_DIM)
        w3, b3 = _init_linear(k3, HIDDEN_DIM, HIDDEN_DIM)
        w4, b4 = _init_linear(k4, HIDDEN_DIM, OUTPUT_DIM)
        params["layers"].append(
            dict(w1=w1, b1=b1, w2=w2, b2=b2, w3=w3, b3=b3, w4=w4, b4=b4))

    objs = jax.random.randint(k_objs, (O,), 0, 185, jnp.int32)
    preds = jax.random.randint(k_preds, (T,), 0, 11, jnp.int32)
    edges = jax.random.randint(k_edges, (T, 2), 0, O, jnp.int32)

    out = jax.block_until_ready(graph_conv_net(objs, preds, edges, params))
    assert out.shape == (O, OUTPUT_DIM) and bool(jnp.all(jnp.isfinite(out)))

    ref = jax.block_until_ready(_reference_forward(objs, preds, edges, params))
    max_err = float(jnp.max(jnp.abs(out - ref)))
    scale = float(jnp.max(jnp.abs(ref))) + 1e-6
    assert max_err <= 5e-2 * scale + 1e-4, (max_err, scale)

    print("KERNEL_OK")
</pallas_src>

<mosaic_0001>
module attributes {stable_mosaic.version = 11 : i64} {
  func.func @_gcn_fused_kernel(%arg0: i32, %arg1: memref<16x128xf32, #tpu.memory_space<vmem>>, %arg2: memref<32x128xf32, #tpu.memory_space<vmem>>, %arg3: memref<32x16xf32, #tpu.memory_space<vmem>>, %arg4: memref<32x16xf32, #tpu.memory_space<vmem>>, %arg5: memref<16x32xf32, #tpu.memory_space<vmem>>, %arg6: memref<16x32xf32, #tpu.memory_space<vmem>>, %arg7: memref<16x1xf32, #tpu.memory_space<vmem>>, %arg8: memref<1x128x128xbf16, #tpu.memory_space<vmem>>, %arg9: memref<1x128x128xbf16, #tpu.memory_space<vmem>>, %arg10: memref<1x128x128xbf16, #tpu.memory_space<vmem>>, %arg11: memref<1x1x128xf32, #tpu.memory_space<vmem>>, %arg12: memref<1x128x384xbf16, #tpu.memory_space<vmem>>, %arg13: memref<1x1x384xf32, #tpu.memory_space<vmem>>, %arg14: memref<1x128x128xbf16, #tpu.memory_space<vmem>>, %arg15: memref<1x1x128xf32, #tpu.memory_space<vmem>>, %arg16: memref<1x128x128xbf16, #tpu.memory_space<vmem>>, %arg17: memref<1x1x128xf32, #tpu.memory_space<vmem>>, %arg18: memref<16x128xf32, #tpu.memory_space<vmem>>, %arg19: memref<32x128xf32, #tpu.memory_space<vmem>>) attributes {dimension_semantics = [#tpu.dimension_semantics<arbitrary>], iteration_bounds = array<i64: 5>, scalar_prefetch = 0 : i64, scratch_operands = 0 : i64, tpu.core_type = #tpu.core_type<tc>, window_params = [{pipeline_mode = #tpu.pipeline_mode<synchronous>, transform_indices = @transform_0, window_bounds = array<i64: 16, 128>}, {pipeline_mode = #tpu.pipeline_mode<synchronous>, transform_indices = @transform_1, window_bounds = array<i64: 32, 128>}, {pipeline_mode = #tpu.pipeline_mode<synchronous>, transform_indices = @transform_2, window_bounds = array<i64: 32, 16>}, {pipeline_mode = #tpu.pipeline_mode<synchronous>, transform_indices = @transform_3, window_bounds = array<i64: 32, 16>}, {pipeline_mode = #tpu.pipeline_mode<synchronous>, transform_indices = @transform_4, window_bounds = array<i64: 16, 32>}, {pipeline_mode = #tpu.pipeline_mode<synchronous>, transform_indices = @transform_5, window_bounds = array<i64: 16, 32>}, {pipeline_mode = #tpu.pipeline_mode<synchronous>, transform_indices = @transform_6, window_bounds = array<i64: 16, 1>}, {transform_indices = @transform_7, window_bounds = array<i64: 1, 128, 128>}, {transform_indices = @transform_8, window_bounds = array<i64: 1, 128, 128>}, {transform_indices = @transform_9, window_bounds = array<i64: 1, 128, 128>}, {transform_indices = @transform_10, window_bounds = array<i64: 1, 1, 128>}, {transform_indices = @transform_11, window_bounds = array<i64: 1, 128, 384>}, {transform_indices = @transform_12, window_bounds = array<i64: 1, 1, 384>}, {transform_indices = @transform_13, window_bounds = array<i64: 1, 128, 128>}, {transform_indices = @transform_14, window_bounds = array<i64: 1, 1, 128>}, {transform_indices = @transform_15, window_bounds = array<i64: 1, 128, 128>}, {transform_indices = @transform_16, window_bounds = array<i64: 1, 1, 128>}, {pipeline_mode = #tpu.pipeline_mode<synchronous>, transform_indices = @transform_17, window_bounds = array<i64: 16, 128>}, {pipeline_mode = #tpu.pipeline_mode<synchronous>, transform_indices = @transform_18, window_bounds = array<i64: 32, 128>}]} {
    %c0_i32 = arith.constant 0 : i32
    %0 = arith.cmpi eq, %arg0, %c0_i32 : i32
    %1 = arith.extui %0 : i1 to i32
    %c0_i32_0 = arith.constant 0 : i32
    %2 = arith.cmpi ne, %1, %c0_i32_0 : i32
    scf.if %2 {
      %c0_61 = arith.constant 0 : index
      %c0_62 = arith.constant 0 : index
      %72 = vector.load %arg1[%c0_61, %c0_62] : memref<16x128xf32, #tpu.memory_space<vmem>>, vector<16x128xf32>
      %c0_63 = arith.constant 0 : index
      %c0_64 = arith.constant 0 : index
      %73 = vector.load %arg18[%c0_63, %c0_64] : memref<16x128xf32, #tpu.memory_space<vmem>>, vector<16x128xf32>
      tpu.vector_store %arg18[%c0_63, %c0_64], %72 {strides = array<i32>} : memref<16x128xf32, #tpu.memory_space<vmem>>, vector<16x128xf32>,
      %c0_65 = arith.constant 0 : index
      %c0_66 = arith.constant 0 : index
      %74 = vector.load %arg2[%c0_65, %c0_66] : memref<32x128xf32, #tpu.memory_space<vmem>>, vector<32x128xf32>
      %c0_67 = arith.constant 0 : index
      %c0_68 = arith.constant 0 : index
      %75 = vector.load %arg19[%c0_67, %c0_68] : memref<32x128xf32, #tpu.memory_space<vmem>>, vector<32x128xf32>
      tpu.vector_store %arg19[%c0_67, %c0_68], %74 {strides = array<i32>} : memref<32x128xf32, #tpu.memory_space<vmem>>, vector<32x128xf32>,
    } else {
    }
    %c0 = arith.constant 0 : index
    %c0_1 = arith.constant 0 : index
    %3 = vector.load %arg18[%c0, %c0_1] : memref<16x128xf32, #tpu.memory_space<vmem>>, vector<16x128xf32>
    %c0_2 = arith.constant 0 : index
    %c0_3 = arith.constant 0 : index
    %4 = vector.load %arg19[%c0_2, %c0_3] : memref<32x128xf32, #tpu.memory_space<vmem>>, vector<32x128xf32>
    %c0_4 = arith.constant 0 : index
    %c0_5 = arith.constant 0 : index
    %5 = vector.load %arg3[%c0_4, %c0_5] : memref<32x16xf32, #tpu.memory_space<vmem>>, vector<32x16xf32>
    %cst = arith.constant dense<0.000000e+00> : vector<32x128xf32>
    %6 = tpu.matmul %5, %3, %cst {dimension_numbers = #tpu.dot_dimension_numbers<[1], [0], [0], [1], [0, 0, 1, 1], [], []>} : vector<32x16xf32>, vector<16x128xf32>, vector<32x128xf32> -> vector<32x128xf32>
    %c0_6 = arith.constant 0 : index
    %c0_7 = arith.constant 0 : index
    %7 = vector.load %arg4[%c0_6, %c0_7] : memref<32x16xf32, #tpu.memory_space<vmem>>, vector<32x16xf32>
    %cst_8 = arith.constant dense<0.000000e+00> : vector<32x128xf32>
    %8 = tpu.matmul %7, %3, %cst_8 {dimension_numbers = #tpu.dot_dimension_numbers<[1], [0], [0], [1], [0, 0, 1, 1], [], []>} : vector<32x16xf32>, vector<16x128xf32>, vector<32x128xf32> -> vector<32x128xf32>
    %9 = arith.truncf %6 : vector<32x128xf32> to vector<32x128xbf16>
    %c0_9 = arith.constant 0 : index
    %c0_10 = arith.constant 0 : index
    %c0_11 = arith.constant 0 : index
    %10 = vector.load %arg8[%c0_9, %c0_10, %c0_11] : memref<1x128x128xbf16, #tpu.memory_space<vmem>>, vector<1x128x128xbf16>
    %11 = vector.shape_cast %10 : vector<1x128x128xbf16> to vector<128x128xbf16>
    %cst_12 = arith.constant dense<0.000000e+00> : vector<32x128xf32>
    %12 = tpu.matmul %9, %11, %cst_12 {dimension_numbers = #tpu.dot_dimension_numbers<[1], [0], [0], [1], [0, 0, 1, 1], [], []>} : vector<32x128xbf16>, vector<128x128xbf16>, vector<32x128xf32> -> vector<32x128xf32>
    %13 = arith.truncf %4 : vector<32x128xf32> to vector<32x128xbf16>
    %c0_13 = arith.constant 0 : index
    %c0_14 = arith.constant 0 : index
    %c0_15 = arith.constant 0 : index
    %14 = vector.load %arg9[%c0_13, %c0_14, %c0_15] : memref<1x128x128xbf16, #tpu.memory_space<vmem>>, vector<1x128x128xbf16>
    %15 = vector.shape_cast %14 : vector<1x128x128xbf16> to vector<128x128xbf16>
    %cst_16 = arith.constant dense<0.000000e+00> : vector<32x128xf32>
    %16 = tpu.matmul %13, %15, %cst_16 {dimension_numbers = #tpu.dot_dimension_numbers<[1], [0], [0], [1], [0, 0, 1, 1], [], []>} : vector<32x128xbf16>, vector<128x128xbf16>, vector<32x128xf32> -> vector<32x128xf32>
    %17 = arith.addf %12, %16 : vector<32x128xf32>
    %18 = arith.truncf %8 : vector<32x128xf32> to vector<32x128xbf16>
    %c0_17 = arith.constant 0 : index
    %c0_18 = arith.constant 0 : index
    %c0_19 = arith.constant 0 : index
    %19 = vector.load %arg10[%c0_17, %c0_18, %c0_19] : memref<1x128x128xbf16, #tpu.memory_space<vmem>>, vector<1x128x128xbf16>
    %20 = vector.shape_cast %19 : vector<1x128x128xbf16> to vector<128x128xbf16>
    %cst_20 = arith.constant dense<0.000000e+00> : vector<32x128xf32>
    %21 = tpu.matmul %18, %20, %cst_20 {dimension_numbers = #tpu.dot_dimension_numbers<[1], [0], [0], [1], [0, 0, 1, 1], [], []>} : vector<32x128xbf16>, vector<128x128xbf16>, vector<32x128xf32> -> vector<32x128xf32>
    %22 = arith.addf %17, %21 : vector<32x128xf32>
    %c0_21 = arith.constant 0 : index
    %c0_22 = arith.constant 0 : index
    %c0_23 = arith.constant 0 : index
    %23 = vector.load %arg11[%c0_21, %c0_22, %c0_23] : memref<1x1x128xf32, #tpu.memory_space<vmem>>, vector<1x1x128xf32>
    %24 = vector.shape_cast %23 : vector<1x1x128xf32> to vector<1x128xf32>
    %25 = vector.broadcast %24 : vector<1x128xf32> to vector<32x128xf32>
    %26 = arith.addf %22, %25 : vector<32x128xf32>
    %cst_24 = arith.constant 0.000000e+00 : f32
    %27 = vector.broadcast %cst_24 : f32 to vector<32x128xf32>
    %28 = arith.maximumf %26, %27 : vector<32x128xf32>
    %29 = arith.truncf %28 : vector<32x128xf32> to vector<32x128xbf16>
    %c0_25 = arith.constant 0 : index
    %c0_26 = arith.constant 0 : index
    %c0_27 = arith.constant 0 : index
    %30 = vector.load %arg12[%c0_25, %c0_26, %c0_27] : memref<1x128x384xbf16, #tpu.memory_space<vmem>>, vector<1x128x384xbf16>
    %31 = vector.shape_cast %30 : vector<1x128x384xbf16> to vector<128x384xbf16>
    %cst_28 = arith.constant dense<0.000000e+00> : vector<32x384xf32>
    %32 = tpu.matmul %29, %31, %cst_28 {dimension_numbers = #tpu.dot_dimension_numbers<[1], [0], [0], [1], [0, 0, 1, 1], [], []>} : vector<32x128xbf16>, vector<128x384xbf16>, vector<32x384xf32> -> vector<32x384xf32>
    %c0_29 = arith.constant 0 : index
    %c0_30 = arith.constant 0 : index
    %c0_31 = arith.constant 0 : index
    %33 = vector.load %arg13[%c0_29, %c0_30, %c0_31] : memref<1x1x384xf32, #tpu.memory_space<vmem>>, vector<1x1x384xf32>
    %34 = vector.shape_cast %33 : vector<1x1x384xf32> to vector<1x384xf32>
    %35 = vector.broadcast %34 : vector<1x384xf32> to vector<32x384xf32>
    %36 = arith.addf %32, %35 : vector<32x384xf32>
    %cst_32 = arith.constant 0.000000e+00 : f32
    %37 = vector.broadcast %cst_32 : f32 to vector<32x384xf32>
    %38 = arith.maximumf %36, %37 : vector<32x384xf32>
    %39 = vector.extract_strided_slice %38 {offsets = [0, 0], sizes = [32, 128], strides = [1, 1]} : vector<32x384xf32> to vector<32x128xf32>
    %40 = vector.extract_strided_slice %38 {offsets = [0, 128], sizes = [32, 128], strides = [1, 1]} : vector<32x384xf32> to vector<32x128xf32>
    %41 = vector.extract_strided_slice %38 {offsets = [0, 256], sizes = [32, 128], strides = [1, 1]} : vector<32x384xf32> to vector<32x128xf32>
    %c0_33 = arith.constant 0 : index
    %c0_34 = arith.constant 0 : index
    %42 = vector.load %arg5[%c0_33, %c0_34] : memref<16x32xf32, #tpu.memory_space<vmem>>, vector<16x32xf32>
    %cst_35 = arith.constant dense<0.000000e+00> : vector<16x128xf32>
    %43 = tpu.matmul %42, %39, %cst_35 {dimension_numbers = #tpu.dot_dimension_numbers<[1], [0], [0], [1], [0, 0, 1, 1], [], []>} : vector<16x32xf32>, vector<32x128xf32>, vector<16x128xf32> -> vector<16x128xf32>
    %c0_36 = arith.constant 0 : index
    %c0_37 = arith.constant 0 : index
    %44 = vector.load %arg6[%c0_36, %c0_37] : memref<16x32xf32, #tpu.memory_space<vmem>>, vector<16x32xf32>
    %cst_38 = arith.constant dense<0.000000e+00> : vector<16x128xf32>
    %45 = tpu.matmul %44, %41, %cst_38 {dimension_numbers = #tpu.dot_dimension_numbers<[1], [0], [0], [1], [0, 0, 1, 1], [], []>} : vector<16x32xf32>, vector<32x128xf32>, vector<16x128xf32> -> vector<16x128xf32>
    %46 = arith.addf %43, %45 : vector<16x128xf32>
    %c0_39 = arith.constant 0 : index
    %c0_40 = arith.constant 0 : index
    %47 = vector.load %arg7[%c0_39, %c0_40] : memref<16x1xf32, #tpu.memory_space<vmem>>, vector<16x1xf32>
    %48 = vector.broadcast %47 : vector<16x1xf32> to vector<16x128xf32>
    %49 = arith.mulf %46, %48 : vector<16x128xf32>
    %50 = arith.truncf %49 : vector<16x128xf32> to vector<16x128xbf16>
    %c0_41 = arith.constant 0 : index
    %c0_42 = arith.constant 0 : index
    %c0_43 = arith.constant 0 : index
    %51 = vector.load %arg14[%c0_41, %c0_42, %c0_43] : memref<1x128x128xbf16, #tpu.memory_space<vmem>>, vector<1x128x128xbf16>
    %52 = vector.shape_cast %51 : vector<1x128x128xbf16> to vector<128x128xbf16>
    %cst_44 = arith.constant dense<0.000000e+00> : vector<16x128xf32>
    %53 = tpu.matmul %50, %52, %cst_44 {dimension_numbers = #tpu.dot_dimension_numbers<[1], [0], [0], [1], [0, 0, 1, 1], [], []>} : vector<16x128xbf16>, vector<128x128xbf16>, vector<16x128xf32> -> vector<16x128xf32>
    %c0_45 = arith.constant 0 : index
    %c0_46 = arith.constant 0 : index
    %c0_47 = arith.constant 0 : index
    %54 = vector.load %arg15[%c0_45, %c0_46, %c0_47] : memref<1x1x128xf32, #tpu.memory_space<vmem>>, vector<1x1x128xf32>
    %55 = vector.shape_cast %54 : vector<1x1x128xf32> to vector<1x128xf32>
    %56 = vector.broadcast %55 : vector<1x128xf32> to vector<16x128xf32>
    %57 = arith.addf %53, %56 : vector<16x128xf32>
    %cst_48 = arith.constant 0.000000e+00 : f32
    %58 = vector.broadcast %cst_48 : f32 to vector<16x128xf32>
    %59 = arith.maximumf %57, %58 : vector<16x128xf32>
    %60 = arith.truncf %59 : vector<16x128xf32> to vector<16x128xbf16>
    %c0_49 = arith.constant 0 : index
    %c0_50 = arith.constant 0 : index
    %c0_51 = arith.constant 0 : index
    %61 = vector.load %arg16[%c0_49, %c0_50, %c0_51] : memref<1x128x128xbf16, #tpu.memory_space<vmem>>, vector<1x128x128xbf16>
    %62 = vector.shape_cast %61 : vector<1x128x128xbf16> to vector<128x128xbf16>
    %cst_52 = arith.constant dense<0.000000e+00> : vector<16x128xf32>
    %63 = tpu.matmul %60, %62, %cst_52 {dimension_numbers = #tpu.dot_dimension_numbers<[1], [0], [0], [1], [0, 0, 1, 1], [], []>} : vector<16x128xbf16>, vector<128x128xbf16>, vector<16x128xf32> -> vector<16x128xf32>
    %c0_53 = arith.constant 0 : index
    %c0_54 = arith.constant 0 : index
    %c0_55 = arith.constant 0 : index
    %64 = vector.load %arg17[%c0_53, %c0_54, %c0_55] : memref<1x1x128xf32, #tpu.memory_space<vmem>>, vector<1x1x128xf32>
    %65 = vector.shape_cast %64 : vector<1x1x128xf32> to vector<1x128xf32>
    %66 = vector.broadcast %65 : vector<1x128xf32> to vector<16x128xf32>
    %67 = arith.addf %63, %66 : vector<16x128xf32>
    %cst_56 = arith.constant 0.000000e+00 : f32
    %68 = vector.broadcast %cst_56 : f32 to vector<16x128xf32>
    %69 = arith.maximumf %67, %68 : vector<16x128xf32>
    %c0_57 = arith.constant 0 : index
    %c0_58 = arith.constant 0 : index
    %70 = vector.load %arg18[%c0_57, %c0_58] : memref<16x128xf32, #tpu.memory_space<vmem>>, vector<16x128xf32>
    tpu.vector_store %arg18[%c0_57, %c0_58], %69 {strides = array<i32>} : memref<16x128xf32, #tpu.memory_space<vmem>>, vector<16x128xf32>,
    %c0_59 = arith.constant 0 : index
    %c0_60 = arith.constant 0 : index
    %71 = vector.load %arg19[%c0_59, %c0_60] : memref<32x128xf32, #tpu.memory_space<vmem>>, vector<32x128xf32>
    tpu.vector_store %arg19[%c0_59, %c0_60], %40 {strides = array<i32>} : memref<32x128xf32, #tpu.memory_space<vmem>>, vector<32x128xf32>,
    return
  }
  func.func @transform_0(%arg0: i32) -> (i32, i32) {
    %c0_i32 = arith.constant 0 : i32
    %c0_i32_0 = arith.constant 0 : i32
    %c0_i32_1 = arith.constant 0 : i32
    return %c0_i32, %c0_i32_0 : i32, i32
  }
  func.func @transform_1(%arg0: i32) -> (i32, i32) {
    %c0_i32 = arith.constant 0 : i32
    %c0_i32_0 = arith.constant 0 : i32
    %c0_i32_1 = arith.constant 0 : i32
    return %c0_i32, %c0_i32_0 : i32, i32
  }
  func.func @transform_2(%arg0: i32) -> (i32, i32) {
    %c0_i32 = arith.constant 0 : i32
    %c0_i32_0 = arith.constant 0 : i32
    %c0_i32_1 = arith.constant 0 : i32
    return %c0_i32, %c0_i32_0 : i32, i32
  }
  func.func @transform_3(%arg0: i32) -> (i32, i32) {
    %c0_i32 = arith.constant 0 : i32
    %c0_i32_0 = arith.constant 0 : i32
    %c0_i32_1 = arith.constant 0 : i32
    return %c0_i32, %c0_i32_0 : i32, i32
  }
  func.func @transform_4(%arg0: i32) -> (i32, i32) {
    %c0_i32 = arith.constant 0 : i32
    %c0_i32_0 = arith.constant 0 : i32
    %c0_i32_1 = arith.constant 0 : i32
    return %c0_i32, %c0_i32_0 : i32, i32
  }
  func.func @transform_5(%arg0: i32) -> (i32, i32) {
    %c0_i32 = arith.constant 0 : i32
    %c0_i32_0 = arith.constant 0 : i32
    %c0_i32_1 = arith.constant 0 : i32
    return %c0_i32, %c0_i32_0 : i32, i32
  }
  func.func @transform_6(%arg0: i32) -> (i32, i32) {
    %c0_i32 = arith.constant 0 : i32
    %c0_i32_0 = arith.constant 0 : i32
    %c0_i32_1 = arith.constant 0 : i32
    return %c0_i32, %c0_i32_0 : i32, i32
  }
  func.func @transform_7(%arg0: i32) -> (i32, i32, i32) {
    %c0_i32 = arith.constant 0 : i32
    %c0_i32_0 = arith.constant 0 : i32
    %c0_i32_1 = arith.constant 0 : i32
    return %arg0, %c0_i32, %c0_i32_0 : i32, i32, i32
  }
  func.func @transform_8(%arg0: i32) -> (i32, i32, i32) {
    %c0_i32 = arith.constant 0 : i32
    %c0_i32_0 = arith.constant 0 : i32
    %c0_i32_1 = arith.constant 0 : i32
    return %arg0, %c0_i32, %c0_i32_0 : i32, i32, i32
  }
  func.func @transform_9(%arg0: i32) -> (i32, i32, i32) {
    %c0_i32 = arith.constant 0 : i32
    %c0_i32_0 = arith.constant 0 : i32
    %c0_i32_1 = arith.constant 0 : i32
    return %arg0, %c0_i32, %c0_i32_0 : i32, i32, i32
  }
  func.func @transform_10(%arg0: i32) -> (i32, i32, i32) {
    %c0_i32 = arith.constant 0 : i32
    %c0_i32_0 = arith.constant 0 : i32
    %c0_i32_1 = arith.constant 0 : i32
    return %arg0, %c0_i32, %c0_i32_0 : i32, i32, i32
  }
  func.func @transform_11(%arg0: i32) -> (i32, i32, i32) {
    %c0_i32 = arith.constant 0 : i32
    %c0_i32_0 = arith.constant 0 : i32
    %c0_i32_1 = arith.constant 0 : i32
    return %arg0, %c0_i32, %c0_i32_0 : i32, i32, i32
  }
  func.func @transform_12(%arg0: i32) -> (i32, i32, i32) {
    %c0_i32 = arith.constant 0 : i32
    %c0_i32_0 = arith.constant 0 : i32
    %c0_i32_1 = arith.constant 0 : i32
    return %arg0, %c0_i32, %c0_i32_0 : i32, i32, i32
  }
  func.func @transform_13(%arg0: i32) -> (i32, i32, i32) {
    %c0_i32 = arith.constant 0 : i32
    %c0_i32_0 = arith.constant 0 : i32
    %c0_i32_1 = arith.constant 0 : i32
    return %arg0, %c0_i32, %c0_i32_0 : i32, i32, i32
  }
  func.func @transform_14(%arg0: i32) -> (i32, i32, i32) {
    %c0_i32 = arith.constant 0 : i32
    %c0_i32_0 = arith.constant 0 : i32
    %c0_i32_1 = arith.constant 0 : i32
    return %arg0, %c0_i32, %c0_i32_0 : i32, i32, i32
  }
  func.func @transform_15(%arg0: i32) -> (i32, i32, i32) {
    %c0_i32 = arith.constant 0 : i32
    %c0_i32_0 = arith.constant 0 : i32
    %c0_i32_1 = arith.constant 0 : i32
    return %arg0, %c0_i32, %c0_i32_0 : i32, i32, i32
  }
  func.func @transform_16(%arg0: i32) -> (i32, i32, i32) {
    %c0_i32 = arith.constant 0 : i32
    %c0_i32_0 = arith.constant 0 : i32
    %c0_i32_1 = arith.constant 0 : i32
    return %arg0, %c0_i32, %c0_i32_0 : i32, i32, i32
  }
  func.func @transform_17(%arg0: i32) -> (i32, i32) {
    %c0_i32 = arith.constant 0 : i32
    %c0_i32_0 = arith.constant 0 : i32
    %c0_i32_1 = arith.constant 0 : i32
    return %c0_i32, %c0_i32_0 : i32, i32
  }
  func.func @transform_18(%arg0: i32) -> (i32, i32) {
    %c0_i32 = arith.constant 0 : i32
    %c0_i32_0 = arith.constant 0 : i32
    %c0_i32_1 = arith.constant 0 : i32
    return %c0_i32, %c0_i32_0 : i32, i32
  }
}

</mosaic_0001>

<llo_original>
// kernel: tpu_custom_call.1
$region0: #{tpu_custom_call.1}
  #allocation0 [shape = 'u32[]', space=smem, size = 0x4, offset = 0x4, fixed_abs, tag = 'smem constant byte address 0x4 - core index']
  #allocation1 [shape = 'u32[72,128]{1,0:T(1,128)}', space=vmem, size = 0x9000, scoped, tag = 'internal scratch']
  %s0 = inlined_call_operand.vmem [shape: f32[16,128], index: 0, kind: input, shape index: {}]
  %s1 = inlined_call_operand.vmem [shape: f32[32,128], index: 1, kind: input, shape index: {}]
  %s2 = inlined_call_operand.vmem [shape: f32[32,16], index: 2, kind: input, shape index: {}]
  %s3 = inlined_call_operand.vmem [shape: f32[32,16], index: 3, kind: input, shape index: {}]
  %s4 = inlined_call_operand.vmem [shape: f32[16,32], index: 4, kind: input, shape index: {}]
  %s5 = inlined_call_operand.vmem [shape: f32[16,32], index: 5, kind: input, shape index: {}]
  %s6 = inlined_call_operand.vmem [shape: f32[16,1], index: 6, kind: input, shape index: {}]
  %s7 = inlined_call_operand.hbm [shape: bf16[5,128,128], index: 7, kind: input, shape index: {}]
  %s8 = inlined_call_operand.hbm [shape: bf16[5,128,128], index: 8, kind: input, shape index: {}]
  %s9 = inlined_call_operand.hbm [shape: bf16[5,128,128], index: 9, kind: input, shape index: {}]
  %s10 = inlined_call_operand.vmem [shape: f32[5,1,128], index: 10, kind: input, shape index: {}]
  %s11 = inlined_call_operand.hbm [shape: bf16[5,128,384], index: 11, kind: input, shape index: {}]
  %s12 = inlined_call_operand.hbm [shape: f32[5,1,384], index: 12, kind: input, shape index: {}]
  %s13 = inlined_call_operand.hbm [shape: bf16[5,128,128], index: 13, kind: input, shape index: {}]
  %s14 = inlined_call_operand.vmem [shape: f32[5,1,128], index: 14, kind: input, shape index: {}]
  %s15 = inlined_call_operand.hbm [shape: bf16[5,128,128], index: 15, kind: input, shape index: {}]
  %s16 = inlined_call_operand.hbm [shape: f32[5,1,128], index: 16, kind: input, shape index: {}]
  %s17 = inlined_call_operand.hbm [shape: f32[16,128], index: 17, kind: output, shape index: {0}]
  %s18 = inlined_call_operand.hbm [shape: f32[32,128], index: 18, kind: output, shape index: {1}]
  %19 = xla_tuple %s17, %s18
  %s20 = sld [smem:[#allocation0]]
  $region145: #{tpu_custom_call.1} parent=0
    _
  %s22 = ssub.s32 1, %s20
  %s23 = scalar_select 0, %s22, %s20
  $region1: #{tpu_custom_call.1} parent=0
    #allocation2 [shape = 'u8[65536]{0}', space=vmem, size = 0x10000, scoped, tag = 'input window, operand 7']
    #allocation3 [shape = 's32[2]{0}', space=sflag, size = 0x8, scoped, tag = 'scoped memory for tpu_custom_call.1']
    #allocation4 [shape = 's32[2]{0}', space=sflag, size = 0x8, scoped, tag = 'scoped memory for tpu_custom_call.1']
    #allocation5 [shape = 'u8[65536]{0}', space=vmem, size = 0x10000, scoped, tag = 'input window, operand 8']
    #allocation6 [shape = 's32[2]{0}', space=sflag, size = 0x8, scoped, tag = 'scoped memory for tpu_custom_call.1']
    #allocation7 [shape = 'u8[65536]{0}', space=vmem, size = 0x10000, scoped, tag = 'input window, operand 9']
    #allocation8 [shape = 'u8[196608]{0}', space=vmem, size = 0x30000, scoped, tag = 'input window, operand 11']
    #allocation9 [shape = 's32[2]{0}', space=sflag, size = 0x8, scoped, tag = 'scoped memory for tpu_custom_call.1']
    #allocation10 [shape = 'u8[3072]{0}', space=vmem, size = 0xc00, scoped, tag = 'input window, operand 12']
    #allocation11 [shape = 'u8[65536]{0}', space=vmem, size = 0x10000, scoped, tag = 'input window, operand 13']
    #allocation12 [shape = 's32[2]{0}', space=sflag, size = 0x8, scoped, tag = 'scoped memory for tpu_custom_call.1']
    #allocation13 [shape = 'u8[65536]{0}', space=vmem, size = 0x10000, scoped, tag = 'input window, operand 15']
    #allocation14 [shape = 'u8[1024]{0}', space=vmem, size = 0x400, scoped, tag = 'input window, operand 16']
    #allocation15 [shape = 's32[2]{0}', space=sflag, size = 0x8, scoped, tag = 'scoped memory for tpu_custom_call.1']
    #allocation16 [shape = 'u8[8192]{0}', space=vmem, size = 0x2000, scoped, tag = 'output window, operand 0, single buffered']
    #allocation17 [shape = 'u8[16384]{0}', space=vmem, size = 0x4000, scoped, tag = 'output window, operand 1, single buffered']
    #allocation18 [shape = 's32[1]{0}', space=sflag, size = 0x4, scoped, tag = 'scoped memory for tpu_custom_call.1']
    %24 = vsyncpa [#allocation3], 0
    %s25 = scalar_lea.sflag [#allocation3], 1
    %26 = vsyncpa %s25, 0
    %27 = vsyncpa [#allocation6], 0
    %s28 = scalar_lea.sflag [#allocation6], 1
    %29 = vsyncpa %s28, 0
    %30 = vsyncpa [#allocation9], 0
    %s31 = scalar_lea.sflag [#allocation9], 1
    %32 = vsyncpa %s31, 0
    %33 = vsyncpa [#allocation12], 0
    %s34 = scalar_lea.sflag [#allocation12], 1
    %35 = vsyncpa %s34, 0
    %36 = vsyncpa [#allocation15], 0
    %s37 = scalar_lea.sflag [#allocation15], 1
    %38 = vsyncpa %s37, 0
    %39 = vsyncpa [#allocation4], 0
    %40 = vsyncpa [#allocation18], 0
    loop: start=0, step=1, limit=7
    $region2: #{tpu_custom_call.1} parent=1 // loop_pre_header
      _
    $region3: #{tpu_custom_call.1} parent=1 // loop_header
      %s42 = sphi 0, %s46
      %p43 = scmp.ge.s32.totalorder %s42, 7
      %s50 = sphi 0, %s50
      %s52 = sphi 0, %s50
      %s53 = sphi 0, %s52
      %s67 = sphi 0, %s53
      %s71 = sphi 0, %s71
      %s73 = sphi 0, %s71
      %s74 = sphi 0, %s73
      %s88 = sphi 0, %s74
      %s92 = sphi 0, %s92
      %s94 = sphi 0, %s92
      %s95 = sphi 0, %s94
      %s109 = sphi 0, %s95
      %s113 = sphi 0, %s113
      %s115 = sphi 0, %s113
      %s116 = sphi 0, %s115
      %s130 = sphi 0, %s116
      %s134 = sphi 0, %s134
      %s136 = sphi 0, %s134
      %s137 = sphi 0, %s136
      %s151 = sphi 0, %s137
      %s155 = sphi 0, %s155
      %s157 = sphi 0, %s155
      %s158 = sphi 0, %s157
      %s172 = sphi 0, %s158
      %s176 = sphi 0, %s176
      %s178 = sphi 0, %s176
      %s179 = sphi 0, %s178
      %s193 = sphi 0, %s179
      %s199 = sphi 0, %s201
      %s202 = sphi 0, %s199
      %s203 = sphi 0, %s202
      %s219 = sphi 0, %s203
      %s225 = sphi 0, %s227
      %s228 = sphi 0, %s225
      %s229 = sphi 0, %s228
      %s245 = sphi 0, %s229
      %s251 = sphi 0, %s253
      %s254 = sphi 0, %s251
      %s255 = sphi 0, %s254
      %s271 = sphi 0, %s255
      %s277 = sphi 0, %s279
      %s280 = sphi 0, %s277
      %s281 = sphi 0, %s280
      %s297 = sphi 0, %s281
      %s303 = sphi 0, %s305
      %s306 = sphi 0, %s303
      %s307 = sphi 0, %s306
      %s323 = sphi 0, %s307
      %s329 = sphi 0, %s331
      %s332 = sphi 0, %s329
      %s333 = sphi 0, %s332
      %s349 = sphi 0, %s333
      %s355 = sphi 0, %s357
      %s358 = sphi 0, %s355
      %s359 = sphi 0, %s358
      %s375 = sphi 0, %s359
      %s381 = sphi 0, %s383
      %s384 = sphi 0, %s381
      %s385 = sphi 0, %s384
      %s401 = sphi 0, %s385
      %s407 = sphi 0, %s409
      %s410 = sphi 0, %s407
      %s411 = sphi 0, %s410
      %s427 = sphi 0, %s411
      %s433 = sphi 0, %s435
      %s436 = sphi 0, %s433
      %s437 = sphi 0, %s436
      %s453 = sphi 0, %s437
      %s457 = sphi 0, %s457
      %s459 = sphi 0, %s457
      %s460 = sphi 0, %s459
      %s474 = sphi 0, %s460
      %s478 = sphi 0, %s478
      %s480 = sphi 0, %s478
      %s481 = sphi 0, %s480
      %s495 = sphi 0, %s481
    $region4: #{tpu_custom_call.1} parent=1 // loop_header_branch
      %45 = sbr.rel (%p43) target = $region8
    $region5: #{tpu_custom_call.1} parent=1 // loop_body
      %s47 = ssub.s32 %s42, 1
      %s48 = ssub.s32 %s42, 2
      %s49 = sadd.s32 %s42, 1
      %s51 = sadd.s32 %s50, 1
      %p54 = scmp.eq.s32.totalorder %s42, 4
      %p55 = scmp.ne.s32.totalorder %s50, %s52
      %p56 = scmp.eq.s32.totalorder %s42, 0
      %p57 = por %p55, %p56
      %p58 = scmp.ne.s32.totalorder %s50, %s52
      %p59 = scmp.eq.s32.totalorder %s47, 4
      %p60 = por %p58, %p59
      %p61 = scmp.ne.s32.totalorder %s52, %s53
      %p62 = scmp.eq.s32.totalorder %s47, 0
      %p63 = por %p61, %p62
      %p64 = scmp.ne.s32.totalorder %s52, %s53
      %p65 = scmp.eq.s32.totalorder %s48, 4
      %p66 = por %p64, %p65
      %p68 = scmp.ne.s32.totalorder %s53, %s67
      %p69 = scmp.eq.s32.totalorder %s48, 0
      %p70 = por %p68, %p69
      %s72 = sadd.s32 %s71, 1
      %p75 = scmp.eq.s32.totalorder %s42, 4
      %p76 = scmp.ne.s32.totalorder %s71, %s73
      %p77 = scmp.eq.s32.totalorder %s42, 0
      %p78 = por %p76, %p77
      %p79 = scmp.ne.s32.totalorder %s71, %s73
      %p80 = scmp.eq.s32.totalorder %s47, 4
      %p81 = por %p79, %p80
      %p82 = scmp.ne.s32.totalorder %s73, %s74
      %p83 = scmp.eq.s32.totalorder %s47, 0
      %p84 = por %p82, %p83
      %p85 = scmp.ne.s32.totalorder %s73, %s74
      %p86 = scmp.eq.s32.totalorder %s48, 4
      %p87 = por %p85, %p86
      %p89 = scmp.ne.s32.totalorder %s74, %s88
      %p90 = scmp.eq.s32.totalorder %s48, 0
      %p91 = por %p89, %p90
      %s93 = sadd.s32 %s92, 1
      %p96 = scmp.eq.s32.totalorder %s42, 4
      %p97 = scmp.ne.s32.totalorder %s92, %s94
      %p98 = scmp.eq.s32.totalorder %s42, 0
      %p99 = por %p97, %p98
      %p100 = scmp.ne.s32.totalorder %s92, %s94
      %p101 = scmp.eq.s32.totalorder %s47, 4
      %p102 = por %p100, %p101
      %p103 = scmp.ne.s32.totalorder %s94, %s95
      %p104 = scmp.eq.s32.totalorder %s47, 0
      %p105 = por %p103, %p104
      %p106 = scmp.ne.s32.totalorder %s94, %s95
      %p107 = scmp.eq.s32.totalorder %s48, 4
      %p108 = por %p106, %p107
      %p110 = scmp.ne.s32.totalorder %s95, %s109
      %p111 = scmp.eq.s32.totalorder %s48, 0
      %p112 = por %p110, %p111
      %s114 = sadd.s32 %s113, 1
      %p117 = scmp.eq.s32.totalorder %s42, 4
      %p118 = scmp.ne.s32.totalorder %s113, %s115
      %p119 = scmp.eq.s32.totalorder %s42, 0
      %p120 = por %p118, %p119
      %p121 = scmp.ne.s32.totalorder %s113, %s115
      %p122 = scmp.eq.s32.totalorder %s47, 4
      %p123 = por %p121, %p122
      %p124 = scmp.ne.s32.totalorder %s115, %s116
      %p125 = scmp.eq.s32.totalorder %s47, 0
      %p126 = por %p124, %p125
      %p127 = scmp.ne.s32.totalorder %s115, %s116
      %p128 = scmp.eq.s32.totalorder %s48, 4
      %p129 = por %p127, %p128
      %p131 = scmp.ne.s32.totalorder %s116, %s130
      %p132 = scmp.eq.s32.totalorder %s48, 0
      %p133 = por %p131, %p132
      %s135 = sadd.s32 %s134, 1
      %p138 = scmp.eq.s32.totalorder %s42, 4
      %p139 = scmp.ne.s32.totalorder %s134, %s136
      %p140 = scmp.eq.s32.totalorder %s42, 0
      %p141 = por %p139, %p140
      %p142 = scmp.ne.s32.totalorder %s134, %s136
      %p143 = scmp.eq.s32.totalorder %s47, 4
      %p144 = por %p142, %p143
      %p145 = scmp.ne.s32.totalorder %s136, %s137
      %p146 = scmp.eq.s32.totalorder %s47, 0
      %p147 = por %p145, %p146
      %p148 = scmp.ne.s32.totalorder %s136, %s137
      %p149 = scmp.eq.s32.totalorder %s48, 4
      %p150 = por %p148, %p149
      %p152 = scmp.ne.s32.totalorder %s137, %s151
      %p153 = scmp.eq.s32.totalorder %s48, 0
      %p154 = por %p152, %p153
      %s156 = sadd.s32 %s155, 1
      %p159 = scmp.eq.s32.totalorder %s42, 4
      %p160 = scmp.ne.s32.totalorder %s155, %s157
      %p161 = scmp.eq.s32.totalorder %s42, 0
      %p162 = por %p160, %p161
      %p163 = scmp.ne.s32.totalorder %s155, %s157
      %p164 = scmp.eq.s32.totalorder %s47, 4
      %p165 = por %p163, %p164
      %p166 = scmp.ne.s32.totalorder %s157, %s158
      %p167 = scmp.eq.s32.totalorder %s47, 0
      %p168 = por %p166, %p167
      %p169 = scmp.ne.s32.totalorder %s157, %s158
      %p170 = scmp.eq.s32.totalorder %s48, 4
      %p171 = por %p169, %p170
      %p173 = scmp.ne.s32.totalorder %s158, %s172
      %p174 = scmp.eq.s32.totalorder %s48, 0
      %p175 = por %p173, %p174
      %s177 = sadd.s32 %s176, 1
      %p180 = scmp.eq.s32.totalorder %s42, 4
      %p181 = scmp.ne.s32.totalorder %s176, %s178
      %p182 = scmp.eq.s32.totalorder %s42, 0
      %p183 = por %p181, %p182
      %p184 = scmp.ne.s32.totalorder %s176, %s178
      %p185 = scmp.eq.s32.totalorder %s47, 4
      %p186 = por %p184, %p185
      %p187 = scmp.ne.s32.totalorder %s178, %s179
      %p188 = scmp.eq.s32.totalorder %s47, 0
      %p189 = por %p187, %p188
      %p190 = scmp.ne.s32.totalorder %s178, %s179
      %p191 = scmp.eq.s32.totalorder %s48, 4
      %p192 = por %p190, %p191
      %p194 = scmp.ne.s32.totalorder %s179, %s193
      %p195 = scmp.eq.s32.totalorder %s48, 0
      %p196 = por %p194, %p195
      %s197 = ssub.s32 %s42, %s49
      %p198 = scmp.eq.s32.totalorder %s197, 0
      %s200 = sadd.s32 %s199, 1
      %s201 = scalar_select %p198, %s199, %s200
      %p204 = pneg %p198
      %p205 = scmp.eq.s32.totalorder %s42, 4
      %p206 = por %p204, %p205
      %p207 = scmp.ne.s32.totalorder %s199, %s202
      %p208 = scmp.eq.s32.totalorder %s42, 0
      %p209 = por %p207, %p208
      %p210 = scmp.ne.s32.totalorder %s199, %s202
      %p211 = scmp.eq.s32.totalorder %s47, 4
      %p212 = por %p210, %p211
      %p213 = scmp.ne.s32.totalorder %s202, %s203
      %p214 = scmp.eq.s32.totalorder %s47, 0
      %p215 = por %p213, %p214
      %p216 = scmp.ne.s32.totalorder %s202, %s203
      %p217 = scmp.eq.s32.totalorder %s48, 4
      %p218 = por %p216, %p217
      %p220 = scmp.ne.s32.totalorder %s203, %s219
      %p221 = scmp.eq.s32.totalorder %s48, 0
      %p222 = por %p220, %p221
      %s223 = ssub.s32 %s42, %s49
      %p224 = scmp.eq.s32.totalorder %s223, 0
      %s226 = sadd.s32 %s225, 1
      %s227 = scalar_select %p224, %s225, %s226
      %p230 = pneg %p224
      %p231 = scmp.eq.s32.totalorder %s42, 4
      %p232 = por %p230, %p231
      %p233 = scmp.ne.s32.totalorder %s225, %s228
      %p234 = scmp.eq.s32.totalorder %s42, 0
      %p235 = por %p233, %p234
      %p236 = scmp.ne.s32.totalorder %s225, %s228
      %p237 = scmp.eq.s32.totalorder %s47, 4
      %p238 = por %p236, %p237
      %p239 = scmp.ne.s32.totalorder %s228, %s229
      %p240 = scmp.eq.s32.totalorder %s47, 0
      %p241 = por %p239, %p240
      %p242 = scmp.ne.s32.totalorder %s228, %s229
      %p243 = scmp.eq.s32.totalorder %s48, 4
      %p244 = por %p242, %p243
      %p246 = scmp.ne.s32.totalorder %s229, %s245
      %p247 = scmp.eq.s32.totalorder %s48, 0
      %p248 = por %p246, %p247
      %s249 = ssub.s32 %s42, %s49
      %p250 = scmp.eq.s32.totalorder %s249, 0
      %s252 = sadd.s32 %s251, 1
      %s253 = scalar_select %p250, %s251, %s252
      %p256 = pneg %p250
      %p257 = scmp.eq.s32.totalorder %s42, 4
      %p258 = por %p256, %p257
      %p259 = scmp.ne.s32.totalorder %s251, %s254
      %p260 = scmp.eq.s32.totalorder %s42, 0
      %p261 = por %p259, %p260
      %p262 = scmp.ne.s32.totalorder %s251, %s254
      %p263 = scmp.eq.s32.totalorder %s47, 4
      %p264 = por %p262, %p263
      %p265 = scmp.ne.s32.totalorder %s254, %s255
      %p266 = scmp.eq.s32.totalorder %s47, 0
      %p267 = por %p265, %p266
      %p268 = scmp.ne.s32.totalorder %s254, %s255
      %p269 = scmp.eq.s32.totalorder %s48, 4
      %p270 = por %p268, %p269
      %p272 = scmp.ne.s32.totalorder %s255, %s271
      %p273 = scmp.eq.s32.totalorder %s48, 0
      %p274 = por %p272, %p273
      %s275 = ssub.s32 %s42, %s49
      %p276 = scmp.eq.s32.totalorder %s275, 0
      %s278 = sadd.s32 %s277, 1
      %s279 = scalar_select %p276, %s277, %s278
      %p282 = pneg %p276
      %p283 = scmp.eq.s32.totalorder %s42, 4
      %p284 = por %p282, %p283
      %p285 = scmp.ne.s32.totalorder %s277, %s280
      %p286 = scmp.eq.s32.totalorder %s42, 0
      %p287 = por %p285, %p286
      %p288 = scmp.ne.s32.totalorder %s277, %s280
      %p289 = scmp.eq.s32.totalorder %s47, 4
      %p290 = por %p288, %p289
      %p291 = scmp.ne.s32.totalorder %s280, %s281
      %p292 = scmp.eq.s32.totalorder %s47, 0
      %p293 = por %p291, %p292
      %p294 = scmp.ne.s32.totalorder %s280, %s281
      %p295 = scmp.eq.s32.totalorder %s48, 4
      %p296 = por %p294, %p295
      %p298 = scmp.ne.s32.totalorder %s281, %s297
      %p299 = scmp.eq.s32.totalorder %s48, 0
      %p300 = por %p298, %p299
      %s301 = ssub.s32 %s42, %s49
      %p302 = scmp.eq.s32.totalorder %s301, 0
      %s304 = sadd.s32 %s303, 1
      %s305 = scalar_select %p302, %s303, %s304
      %p308 = pneg %p302
      %p309 = scmp.eq.s32.totalorder %s42, 4
      %p310 = por %p308, %p309
      %p311 = scmp.ne.s32.totalorder %s303, %s306
      %p312 = scmp.eq.s32.totalorder %s42, 0
      %p313 = por %p311, %p312
      %p314 = scmp.ne.s32.totalorder %s303, %s306
      %p315 = scmp.eq.s32.totalorder %s47, 4
      %p316 = por %p314, %p315
      %p317 = scmp.ne.s32.totalorder %s306, %s307
      %p318 = scmp.eq.s32.totalorder %s47, 0
      %p319 = por %p317, %p318
      %p320 = scmp.ne.s32.totalorder %s306, %s307
      %p321 = scmp.eq.s32.totalorder %s48, 4
      %p322 = por %p320, %p321
      %p324 = scmp.ne.s32.totalorder %s307, %s323
      %p325 = scmp.eq.s32.totalorder %s48, 0
      %p326 = por %p324, %p325
      %s327 = ssub.s32 %s42, %s49
      %p328 = scmp.eq.s32.totalorder %s327, 0
      %s330 = sadd.s32 %s329, 1
      %s331 = scalar_select %p328, %s329, %s330
      %p334 = pneg %p328
      %p335 = scmp.eq.s32.totalorder %s42, 4
      %p336 = por %p334, %p335
      %p337 = scmp.ne.s32.totalorder %s329, %s332
      %p338 = scmp.eq.s32.totalorder %s42, 0
      %p339 = por %p337, %p338
      %p340 = scmp.ne.s32.totalorder %s329, %s332
      %p341 = scmp.eq.s32.totalorder %s47, 4
      %p342 = por %p340, %p341
      %p343 = scmp.ne.s32.totalorder %s332, %s333
      %p344 = scmp.eq.s32.totalorder %s47, 0
      %p345 = por %p343, %p344
      %p346 = scmp.ne.s32.totalorder %s332, %s333
      %p347 = scmp.eq.s32.totalorder %s48, 4
      %p348 = por %p346, %p347
      %p350 = scmp.ne.s32.totalorder %s333, %s349
      %p351 = scmp.eq.s32.totalorder %s48, 0
      %p352 = por %p350, %p351
      %s353 = ssub.s32 %s42, %s49
      %p354 = scmp.eq.s32.totalorder %s353, 0
      %s356 = sadd.s32 %s355, 1
      %s357 = scalar_select %p354, %s355, %s356
      %p360 = pneg %p354
      %p361 = scmp.eq.s32.totalorder %s42, 4
      %p362 = por %p360, %p361
      %p363 = scmp.ne.s32.totalorder %s355, %s358
      %p364 = scmp.eq.s32.totalorder %s42, 0
      %p365 = por %p363, %p364
      %p366 = scmp.ne.s32.totalorder %s355, %s358
      %p367 = scmp.eq.s32.totalorder %s47, 4
      %p368 = por %p366, %p367
      %p369 = scmp.ne.s32.totalorder %s358, %s359
      %p370 = scmp.eq.s32.totalorder %s47, 0
      %p371 = por %p369, %p370
      %p372 = scmp.ne.s32.totalorder %s358, %s359
      %p373 = scmp.eq.s32.totalorder %s48, 4
      %p374 = por %p372, %p373
      %p376 = scmp.ne.s32.totalorder %s359, %s375
      %p377 = scmp.eq.s32.totalorder %s48, 0
      %p378 = por %p376, %p377
      %s379 = ssub.s32 %s42, %s49
      %p380 = scmp.eq.s32.totalorder %s379, 0
      %s382 = sadd.s32 %s381, 1
      %s383 = scalar_select %p380, %s381, %s382
      %p386 = pneg %p380
      %p387 = scmp.eq.s32.totalorder %s42, 4
      %p388 = por %p386, %p387
      %p389 = scmp.ne.s32.totalorder %s381, %s384
      %p390 = scmp.eq.s32.totalorder %s42, 0
      %p391 = por %p389, %p390
      %p392 = scmp.ne.s32.totalorder %s381, %s384
      %p393 = scmp.eq.s32.totalorder %s47, 4
      %p394 = por %p392, %p393
      %p395 = scmp.ne.s32.totalorder %s384, %s385
      %p396 = scmp.eq.s32.totalorder %s47, 0
      %p397 = por %p395, %p396
      %p398 = scmp.ne.s32.totalorder %s384, %s385
      %p399 = scmp.eq.s32.totalorder %s48, 4
      %p400 = por %p398, %p399
      %p402 = scmp.ne.s32.totalorder %s385, %s401
      %p403 = scmp.eq.s32.totalorder %s48, 0
      %p404 = por %p402, %p403
      %s405 = ssub.s32 %s42, %s49
      %p406 = scmp.eq.s32.totalorder %s405, 0
      %s408 = sadd.s32 %s407, 1
      %s409 = scalar_select %p406, %s407, %s408
      %p412 = pneg %p406
      %p413 = scmp.eq.s32.totalorder %s42, 4
      %p414 = por %p412, %p413
      %p415 = scmp.ne.s32.totalorder %s407, %s410
      %p416 = scmp.eq.s32.totalorder %s42, 0
      %p417 = por %p415, %p416
      %p418 = scmp.ne.s32.totalorder %s407, %s410
      %p419 = scmp.eq.s32.totalorder %s47, 4
      %p420 = por %p418, %p419
      %p421 = scmp.ne.s32.totalorder %s410, %s411
      %p422 = scmp.eq.s32.totalorder %s47, 0
      %p423 = por %p421, %p422
      %p424 = scmp.ne.s32.totalorder %s410, %s411
      %p425 = scmp.eq.s32.totalorder %s48, 4
      %p426 = por %p424, %p425
      %p428 = scmp.ne.s32.totalorder %s411, %s427
      %p429 = scmp.eq.s32.totalorder %s48, 0
      %p430 = por %p428, %p429
      %s431 = ssub.s32 %s42, %s49
      %p432 = scmp.eq.s32.totalorder %s431, 0
      %s434 = sadd.s32 %s433, 1
      %s435 = scalar_select %p432, %s433, %s434
      %p438 = pneg %p432
      %p439 = scmp.eq.s32.totalorder %s42, 4
      %p440 = por %p438, %p439
      %p441 = scmp.ne.s32.totalorder %s433, %s436
      %p442 = scmp.eq.s32.totalorder %s42, 0
      %p443 = por %p441, %p442
      %p444 = scmp.ne.s32.totalorder %s433, %s436
      %p445 = scmp.eq.s32.totalorder %s47, 4
      %p446 = por %p444, %p445
      %p447 = scmp.ne.s32.totalorder %s436, %s437
      %p448 = scmp.eq.s32.totalorder %s47, 0
      %p449 = por %p447, %p448
      %p450 = scmp.ne.s32.totalorder %s436, %s437
      %p451 = scmp.eq.s32.totalorder %s48, 4
      %p452 = por %p450, %p451
      %p454 = scmp.ne.s32.totalorder %s437, %s453
      %p455 = scmp.eq.s32.totalorder %s48, 0
      %p456 = por %p454, %p455
      %s458 = sadd.s32 %s457, 1
      %p461 = scmp.eq.s32.totalorder %s42, 4
      %p462 = scmp.ne.s32.totalorder %s457, %s459
      %p463 = scmp.eq.s32.totalorder %s42, 0
      %p464 = por %p462, %p463
      %p465 = scmp.ne.s32.totalorder %s457, %s459
      %p466 = scmp.eq.s32.totalorder %s47, 4
      %p467 = por %p465, %p466
      %p468 = scmp.ne.s32.totalorder %s459, %s460
      %p469 = scmp.eq.s32.totalorder %s47, 0
      %p470 = por %p468, %p469
      %p471 = scmp.ne.s32.totalorder %s459, %s460
      %p472 = scmp.eq.s32.totalorder %s48, 4
      %p473 = por %p471, %p472
      %p475 = scmp.ne.s32.totalorder %s460, %s474
      %p476 = scmp.eq.s32.totalorder %s48, 0
      %p477 = por %p475, %p476
      %s479 = sadd.s32 %s478, 1
      %p482 = scmp.eq.s32.totalorder %s42, 4
      %p483 = scmp.ne.s32.totalorder %s478, %s480
      %p484 = scmp.eq.s32.totalorder %s42, 0
      %p485 = por %p483, %p484
      %p486 = scmp.ne.s32.totalorder %s478, %s480
      %p487 = scmp.eq.s32.totalorder %s47, 4
      %p488 = por %p486, %p487
      %p489 = scmp.ne.s32.totalorder %s480, %s481
      %p490 = scmp.eq.s32.totalorder %s47, 0
      %p491 = por %p489, %p490
      %p492 = scmp.ne.s32.totalorder %s480, %s481
      %p493 = scmp.eq.s32.totalorder %s48, 4
      %p494 = por %p492, %p493
      %p496 = scmp.ne.s32.totalorder %s481, %s495
      %p497 = scmp.eq.s32.totalorder %s48, 0
      %p498 = por %p496, %p497
      %p499 = scmp.le.s32.totalorder 1, %s42
      %p500 = scmp.lt.s32.totalorder %s42, 6
      %p501 = pnand %p499, %p500
      %p502 = pneg %p501
      // Predicated region
      $region9: #{tpu_custom_call.1} parent=5 // pred_check
        _
      $region10: #{tpu_custom_call.1} parent=5 // pred_check_branch
        %504 = sbr.rel (%p501) target = $region12
      $region11: #{tpu_custom_call.1} parent=5 // pred_region
        %s505 = ssub.s32 %s42, 1
        // Predicated region
        $region13: #{tpu_custom_call.1} parent=11 // pred_check
          %p506 = pneg %p63
        $region14: #{tpu_custom_call.1} parent=11 // pred_check_branch
          %508 = sbr.rel (%p506) target = $region16
        $region15: #{tpu_custom_call.1} parent=11 // pred_region
          _
        $region16: #{tpu_custom_call.1} parent=11 // pred_fallthru
          _
        // Predicated region
        $region17: #{tpu_custom_call.1} parent=11 // pred_check
          %p509 = pneg %p84
        $region18: #{tpu_custom_call.1} parent=11 // pred_check_branch
          %511 = sbr.rel (%p509) target = $region20
        $region19: #{tpu_custom_call.1} parent=11 // pred_region
          _
        $region20: #{tpu_custom_call.1} parent=11 // pred_fallthru
          _
        // Predicated region
        $region21: #{tpu_custom_call.1} parent=11 // pred_check
          %p512 = pneg %p105
        $region22: #{tpu_custom_call.1} parent=11 // pred_check_branch
          %514 = sbr.rel (%p512) target = $region24
        $region23: #{tpu_custom_call.1} parent=11 // pred_region
          _
        $region24: #{tpu_custom_call.1} parent=11 // pred_fallthru
          _
        // Predicated region
        $region25: #{tpu_custom_call.1} parent=11 // pred_check
          %p515 = pneg %p126
        $region26: #{tpu_custom_call.1} parent=11 // pred_check_branch
          %517 = sbr.rel (%p515) target = $region28
        $region27: #{tpu_custom_call.1} parent=11 // pred_region
          _
        $region28: #{tpu_custom_call.1} parent=11 // pred_fallthru
          _
        // Predicated region
        $region29: #{tpu_custom_call.1} parent=11 // pred_check
          %p518 = pneg %p147
        $region30: #{tpu_custom_call.1} parent=11 // pred_check_branch
          %520 = sbr.rel (%p518) target = $region32
        $region31: #{tpu_custom_call.1} parent=11 // pred_region
          _
        $region32: #{tpu_custom_call.1} parent=11 // pred_fallthru
          _
        // Predicated region
        $region33: #{tpu_custom_call.1} parent=11 // pred_check
          %p521 = pneg %p168
        $region34: #{tpu_custom_call.1} parent=11 // pred_check_branch
          %523 = sbr.rel (%p521) target = $region36
        $region35: #{tpu_custom_call.1} parent=11 // pred_region
          _
        $region36: #{tpu_custom_call.1} parent=11 // pred_fallthru
          _
        // Predicated region
        $region37: #{tpu_custom_call.1} parent=11 // pred_check
          %p524 = pneg %p189
        $region38: #{tpu_custom_call.1} parent=11 // pred_check_branch
          %526 = sbr.rel (%p524) target = $region40
        $region39: #{tpu_custom_call.1} parent=11 // pred_region
          _
        $region40: #{tpu_custom_call.1} parent=11 // pred_fallthru
          _
      $region12: #{tpu_custom_call.1} parent=5 // pred_fallthru
        _
      %p527 = scmp.lt.s32.totalorder %s42, 5
      // Predicated region
      $region41: #{tpu_custom_call.1} parent=5 // pred_check
        %p528 = pneg %p527
      $region42: #{tpu_custom_call.1} parent=5 // pred_check_branch
        %530 = sbr.rel (%p528) target = $region44
      $region43: #{tpu_custom_call.1} parent=5 // pred_region
        // Predicated region
        $region45: #{tpu_custom_call.1} parent=43 // pred_check
          %p531 = pneg %p209
        $region46: #{tpu_custom_call.1} parent=43 // pred_check_branch
          %533 = sbr.rel (%p531) target = $region48
        $region47: #{tpu_custom_call.1} parent=43 // pred_region
          %s534 = sand.u32 %s199, 1
          %s535 = scalar_lea.sflag [#allocation3], %s534
          %s536 = sand.u32 %s199, 1
          %s537 = smul.addr %s536, 64
          %s538 = scalar_lea.vmem [#allocation2], %s537
          %540 = vsyncadd %s535, 0
          %s541 = smul.addr %s42, 16
          %s542 = smul.addr %s541, 4
          %s543 = scalar_lea.hbm %s7, %s542
          %s544 = sshll.u32 %s543, 4
          %s545 = int_to_ptr.hbm [resolvable:$true] %s544
          %s546 = sshll.u32 %s538, 4
          %s547 = int_to_ptr.vmem [resolvable:$true] %s546
          %552 = dma.hbm_to_vmem [thread:$0]  %s545, 1024, %s547, %s535, 64, 64, 4
        $region48: #{tpu_custom_call.1} parent=43 // pred_fallthru
          _
        // Predicated region
        $region49: #{tpu_custom_call.1} parent=43 // pred_check
          %p553 = pneg %p235
        $region50: #{tpu_custom_call.1} parent=43 // pred_check_branch
          %555 = sbr.rel (%p553) target = $region52
        $region51: #{tpu_custom_call.1} parent=43 // pred_region
          %s556 = sand.u32 %s42, 1
          %s557 = scalar_lea.sflag [#allocation6], %s556
          %s558 = sand.u32 %s225, 1
          %s559 = smul.addr %s558, 64
          %s560 = scalar_lea.vmem [#allocation5], %s559
          %562 = vsyncadd %s557, 0
          %s563 = smul.addr %s42, 16
          %s564 = smul.addr %s563, 4
          %s565 = scalar_lea.hbm %s8, %s564
          %s566 = sshll.u32 %s565, 4
          %s567 = int_to_ptr.hbm [resolvable:$true] %s566
          %s568 = sshll.u32 %s560, 4
          %s569 = int_to_ptr.vmem [resolvable:$true] %s568
          %574 = dma.hbm_to_vmem [thread:$0]  %s567, 1024, %s569, %s557, 64, 64, 4
        $region52: #{tpu_custom_call.1} parent=43 // pred_fallthru
          _
        // Predicated region
        $region53: #{tpu_custom_call.1} parent=43 // pred_check
          %p575 = pneg %p261
        $region54: #{tpu_custom_call.1} parent=43 // pred_check_branch
          %577 = sbr.rel (%p575) target = $region56
        $region55: #{tpu_custom_call.1} parent=43 // pred_region
          %s578 = sand.u32 %s42, 1
          %s579 = scalar_lea.sflag [#allocation6], %s578
          %s580 = sand.u32 %s251, 1
          %s581 = smul.addr %s580, 64
          %s582 = scalar_lea.vmem [#allocation7], %s581
          %584 = vsyncadd %s579, 0
          %s585 = smul.addr %s42, 16
          %s586 = smul.addr %s585, 4
          %s587 = scalar_lea.hbm %s9, %s586
          %s588 = sshll.u32 %s587, 4
          %s589 = int_to_ptr.hbm [resolvable:$true] %s588
          %s590 = sshll.u32 %s582, 4
          %s591 = int_to_ptr.vmem [resolvable:$true] %s590
          %596 = dma.hbm_to_vmem [thread:$0]  %s589, 1024, %s591, %s579, 64, 64, 4
        $region56: #{tpu_custom_call.1} parent=43 // pred_fallthru
          _
        // Predicated region
        $region57: #{tpu_custom_call.1} parent=43 // pred_check
          %p597 = pneg %p287
        $region58: #{tpu_custom_call.1} parent=43 // pred_check_branch
          %599 = sbr.rel (%p597) target = $region60
        $region59: #{tpu_custom_call.1} parent=43 // pred_region
          %p600 = scmp.lt.s32.totalorder %s42, 4
          %s601 = scalar_select %p600, %s42, 4
          %s602 = scalar_lea.vmem %s10, %s601
        $region60: #{tpu_custom_call.1} parent=43 // pred_fallthru
          _
        // Predicated region
        $region61: #{tpu_custom_call.1} parent=43 // pred_check
          %p603 = pneg %p313
        $region62: #{tpu_custom_call.1} parent=43 // pred_check_branch
          %605 = sbr.rel (%p603) target = $region64
        $region63: #{tpu_custom_call.1} parent=43 // pred_region
          %s606 = sand.u32 %s42, 1
          %s607 = scalar_lea.sflag [#allocation9], %s606
          %s608 = sand.u32 %s303, 1
          %s609 = smul.addr %s608, 192
          %s610 = scalar_lea.vmem [#allocation8], %s609
          %612 = vsyncadd %s607, 0
          %s613 = smul.addr %s42, 48
          %s614 = smul.addr %s613, 4
          %s615 = scalar_lea.hbm %s11, %s614
          %s616 = sshll.u32 %s615, 4
          %s617 = int_to_ptr.hbm [resolvable:$true] %s616
          %s618 = sshll.u32 %s610, 4
          %s619 = int_to_ptr.vmem [resolvable:$true] %s618
          %624 = dma.hbm_to_vmem [thread:$0]  %s617, 3072, %s619, %s607, 192, 192, 12
        $region64: #{tpu_custom_call.1} parent=43 // pred_fallthru
          _
        // Predicated region
        $region65: #{tpu_custom_call.1} parent=43 // pred_check
          %p625 = pneg %p339
        $region66: #{tpu_custom_call.1} parent=43 // pred_check_branch
          %627 = sbr.rel (%p625) target = $region68
        $region67: #{tpu_custom_call.1} parent=43 // pred_region
          %s628 = sand.u32 %s42, 1
          %s629 = scalar_lea.sflag [#allocation9], %s628
          %s630 = sand.u32 %s329, 1
          %s631 = smul.addr %s630, 3
          %s632 = scalar_lea.vmem [#allocation10], %s631
          %634 = vsyncadd %s629, 0
          %s635 = smul.addr %s42, 3
          %s636 = scalar_lea.hbm %s12, %s635
          %s638 = sshll.u32 %s636, 4
          %s639 = int_to_ptr.hbm [resolvable:$true] %s638
          %s640 = sshll.u32 %s632, 4
          %s641 = int_to_ptr.vmem [resolvable:$true] %s640
          %643 = dma.hbm_to_vmem [thread:$0]  %s639, 48, %s641, %s629
        $region68: #{tpu_custom_call.1} parent=43 // pred_fallthru
          _
        // Predicated region
        $region69: #{tpu_custom_call.1} parent=43 // pred_check
          %p644 = pneg %p365
        $region70: #{tpu_custom_call.1} parent=43 // pred_check_branch
          %646 = sbr.rel (%p644) target = $region72
        $region71: #{tpu_custom_call.1} parent=43 // pred_region
          %s647 = sand.u32 %s42, 1
          %s648 = scalar_lea.sflag [#allocation12], %s647
          %s649 = sand.u32 %s355, 1
          %s650 = smul.addr %s649, 64
          %s651 = scalar_lea.vmem [#allocation11], %s650
          %653 = vsyncadd %s648, 0
          %s654 = smul.addr %s42, 16
          %s655 = smul.addr %s654, 4
          %s656 = scalar_lea.hbm %s13, %s655
          %s657 = sshll.u32 %s656, 4
          %s658 = int_to_ptr.hbm [resolvable:$true] %s657
          %s659 = sshll.u32 %s651, 4
          %s660 = int_to_ptr.vmem [resolvable:$true] %s659
          %665 = dma.hbm_to_vmem [thread:$0]  %s658, 1024, %s660, %s648, 64, 64, 4
        $region72: #{tpu_custom_call.1} parent=43 // pred_fallthru
          _
        // Predicated region
        $region73: #{tpu_custom_call.1} parent=43 // pred_check
          %p666 = pneg %p391
        $region74: #{tpu_custom_call.1} parent=43 // pred_check_branch
          %668 = sbr.rel (%p666) target = $region76
        $region75: #{tpu_custom_call.1} parent=43 // pred_region
          %p669 = scmp.lt.s32.totalorder %s42, 4
          %s670 = scalar_select %p669, %s42, 4
          %s671 = scalar_lea.vmem %s14, %s670
        $region76: #{tpu_custom_call.1} parent=43 // pred_fallthru
          _
        // Predicated region
        $region77: #{tpu_custom_call.1} parent=43 // pred_check
          %p672 = pneg %p417
        $region78: #{tpu_custom_call.1} parent=43 // pred_check_branch
          %674 = sbr.rel (%p672) target = $region80
        $region79: #{tpu_custom_call.1} parent=43 // pred_region
          %s675 = sand.u32 %s42, 1
          %s676 = scalar_lea.sflag [#allocation12], %s675
          %s677 = sand.u32 %s407, 1
          %s678 = smul.addr %s677, 64
          %s679 = scalar_lea.vmem [#allocation13], %s678
          %681 = vsyncadd %s676, 0
          %s682 = smul.addr %s42, 16
          %s683 = smul.addr %s682, 4
          %s684 = scalar_lea.hbm %s15, %s683
          %s685 = sshll.u32 %s684, 4
          %s686 = int_to_ptr.hbm [resolvable:$true] %s685
          %s687 = sshll.u32 %s679, 4
          %s688 = int_to_ptr.vmem [resolvable:$true] %s687
          %693 = dma.hbm_to_vmem [thread:$0]  %s686, 1024, %s688, %s676, 64, 64, 4
        $region80: #{tpu_custom_call.1} parent=43 // pred_fallthru
          _
        // Predicated region
        $region81: #{tpu_custom_call.1} parent=43 // pred_check
          %p694 = pneg %p443
        $region82: #{tpu_custom_call.1} parent=43 // pred_check_branch
          %696 = sbr.rel (%p694) target = $region84
        $region83: #{tpu_custom_call.1} parent=43 // pred_region
          %s697 = sand.u32 %s433, 1
          %s698 = scalar_lea.sflag [#allocation15], %s697
          %s699 = sand.u32 %s433, 1
          %s700 = scalar_lea.vmem [#allocation14], %s699
          %702 = vsyncadd %s698, 0
          %s703 = scalar_lea.hbm %s16, %s42
          %s705 = sshll.u32 %s703, 4
          %s706 = int_to_ptr.hbm [resolvable:$true] %s705
          %s707 = sshll.u32 %s700, 4
          %s708 = int_to_ptr.vmem [resolvable:$true] %s707
          %710 = dma.hbm_to_vmem [thread:$0]  %s706, 16, %s708, %s698
        $region84: #{tpu_custom_call.1} parent=43 // pred_fallthru
          _
      $region44: #{tpu_custom_call.1} parent=5 // pred_fallthru
        _
      %p711 = scmp.le.s32.totalorder 1, %s42
      %p712 = scmp.lt.s32.totalorder %s42, 6
      %p713 = pnand %p711, %p712
      %p714 = pneg %p713
      // Predicated region
      $region85: #{tpu_custom_call.1} parent=5 // pred_check
        _
      $region86: #{tpu_custom_call.1} parent=5 // pred_check_branch
        %716 = sbr.rel (%p713) target = $region88
      $region87: #{tpu_custom_call.1} parent=5 // pred_region
        %s717 = ssub.s32 %s42, 1
        %s718 = sand.u32 %s202, 1
        %s719 = scalar_lea.sflag [#allocation3], %s718
        %s720 = sand.u32 %s202, 1
        %s721 = smul.addr %s720, 64
        %s722 = scalar_lea.vmem [#allocation2], %s721
        // Predicated region
        $region89: #{tpu_custom_call.1} parent=87 // pred_check
          %p723 = pneg %p215
        $region90: #{tpu_custom_call.1} parent=87 // pred_check_branch
          %725 = sbr.rel (%p723) target = $region92
        $region91: #{tpu_custom_call.1} parent=87 // pred_region
          %727 = dma.done %s719, 1024
        $region92: #{tpu_custom_call.1} parent=87 // pred_fallthru
          _
        %s728 = sand.u32 %s47, 1
        %s729 = scalar_lea.sflag [#allocation6], %s728
        %s730 = sand.u32 %s228, 1
        %s731 = smul.addr %s730, 64
        %s732 = scalar_lea.vmem [#allocation5], %s731
        // Predicated region
        $region93: #{tpu_custom_call.1} parent=87 // pred_check
          %p733 = pneg %p241
        $region94: #{tpu_custom_call.1} parent=87 // pred_check_branch
          %735 = sbr.rel (%p733) target = $region96
        $region95: #{tpu_custom_call.1} parent=87 // pred_region
          %737 = dma.done %s729, 1024
        $region96: #{tpu_custom_call.1} parent=87 // pred_fallthru
          _
        %s738 = sand.u32 %s47, 1
        %s739 = scalar_lea.sflag [#allocation6], %s738
        %s740 = sand.u32 %s254, 1
        %s741 = smul.addr %s740, 64
        %s742 = scalar_lea.vmem [#allocation7], %s741
        // Predicated region
        $region97: #{tpu_custom_call.1} parent=87 // pred_check
          %p743 = pneg %p267
        $region98: #{tpu_custom_call.1} parent=87 // pred_check_branch
          %745 = sbr.rel (%p743) target = $region100
        $region99: #{tpu_custom_call.1} parent=87 // pred_region
          %747 = dma.done %s739, 1024
        $region100: #{tpu_custom_call.1} parent=87 // pred_fallthru
          _
        %s748 = sand.u32 %s47, 1
        %s749 = scalar_lea.sflag [#allocation9], %s748
        %s750 = sand.u32 %s306, 1
        %s751 = smul.addr %s750, 192
        %s752 = scalar_lea.vmem [#allocation8], %s751
        // Predicated region
        $region101: #{tpu_custom_call.1} parent=87 // pred_check
          %p753 = pneg %p319
        $region102: #{tpu_custom_call.1} parent=87 // pred_check_branch
          %755 = sbr.rel (%p753) target = $region104
        $region103: #{tpu_custom_call.1} parent=87 // pred_region
          %757 = dma.done %s749, 3072
        $region104: #{tpu_custom_call.1} parent=87 // pred_fallthru
          _
        %s758 = sand.u32 %s47, 1
        %s759 = scalar_lea.sflag [#allocation9], %s758
        %s760 = sand.u32 %s332, 1
        %s761 = smul.addr %s760, 3
        %s762 = scalar_lea.vmem [#allocation10], %s761
        // Predicated region
        $region105: #{tpu_custom_call.1} parent=87 // pred_check
          %p763 = pneg %p345
        $region106: #{tpu_custom_call.1} parent=87 // pred_check_branch
          %765 = sbr.rel (%p763) target = $region108
        $region107: #{tpu_custom_call.1} parent=87 // pred_region
          %767 = dma.done %s759, 48
        $region108: #{tpu_custom_call.1} parent=87 // pred_fallthru
          _
        %s768 = sand.u32 %s47, 1
        %s769 = scalar_lea.sflag [#allocation12], %s768
        %s770 = sand.u32 %s358, 1
        %s771 = smul.addr %s770, 64
        %s772 = scalar_lea.vmem [#allocation11], %s771
        // Predicated region
        $region109: #{tpu_custom_call.1} parent=87 // pred_check
          %p773 = pneg %p371
        $region110: #{tpu_custom_call.1} parent=87 // pred_check_branch
          %775 = sbr.rel (%p773) target = $region112
        $region111: #{tpu_custom_call.1} parent=87 // pred_region
          %777 = dma.done %s769, 1024
        $region112: #{tpu_custom_call.1} parent=87 // pred_fallthru
          _
        %s778 = sand.u32 %s47, 1
        %s779 = scalar_lea.sflag [#allocation12], %s778
        %s780 = sand.u32 %s410, 1
        %s781 = smul.addr %s780, 64
        %s782 = scalar_lea.vmem [#allocation13], %s781
        // Predicated region
        $region113: #{tpu_custom_call.1} parent=87 // pred_check
          %p783 = pneg %p423
        $region114: #{tpu_custom_call.1} parent=87 // pred_check_branch
          %785 = sbr.rel (%p783) target = $region116
        $region115: #{tpu_custom_call.1} parent=87 // pred_region
          %787 = dma.done %s779, 1024
        $region116: #{tpu_custom_call.1} parent=87 // pred_fallthru
          _
        %s788 = sand.u32 %s436, 1
        %s789 = scalar_lea.sflag [#allocation15], %s788
        %s790 = sand.u32 %s436, 1
        %s791 = scalar_lea.vmem [#allocation14], %s790
        // Predicated region
        $region117: #{tpu_custom_call.1} parent=87 // pred_check
          %p792 = pneg %p449
        $region118: #{tpu_custom_call.1} parent=87 // pred_check_branch
          %794 = sbr.rel (%p792) target = $region120
        $region119: #{tpu_custom_call.1} parent=87 // pred_region
          %796 = dma.done %s789, 16
        $region120: #{tpu_custom_call.1} parent=87 // pred_fallthru
          _
        %p797 = pneg %p63
        %p798 = pneg %p60
        %p799 = pneg %p84
        %p800 = pneg %p81
        %p801 = pneg %p105
        %p802 = pneg %p102
        %p803 = pneg %p126
        %p804 = pneg %p123
        %p805 = pneg %p147
        %p806 = pneg %p144
        %p807 = pneg %p168
        %p808 = pneg %p165
        %p809 = pneg %p189
        %p810 = pneg %p186
        %s811 = sand.u32 %s202, 1
        %s812 = scalar_lea.sflag [#allocation3], %s811
        %s813 = sand.u32 %s202, 1
        %s814 = smul.addr %s813, 64
        %s815 = scalar_lea.vmem [#allocation2], %s814
        %p816 = pneg %p215
        %p817 = pneg %p212
        %s818 = sand.u32 %s47, 1
        %s819 = scalar_lea.sflag [#allocation6], %s818
        %s820 = sand.u32 %s228, 1
        %s821 = smul.addr %s820, 64
        %s822 = scalar_lea.vmem [#allocation5], %s821
        %p823 = pneg %p241
        %p824 = pneg %p238
        %s825 = sand.u32 %s47, 1
        %s826 = scalar_lea.sflag [#allocation6], %s825
        %s827 = sand.u32 %s254, 1
        %s828 = smul.addr %s827, 64
        %s829 = scalar_lea.vmem [#allocation7], %s828
        %p830 = pneg %p267
        %p831 = pneg %p264
        %p832 = scmp.lt.s32.totalorder %s47, 4
        %s833 = scalar_select %p832, %s47, 4
        %s834 = scalar_lea.vmem %s10, %s833
        %p835 = pneg %p293
        %p836 = pneg %p290
        %s837 = sand.u32 %s47, 1
        %s838 = scalar_lea.sflag [#allocation9], %s837
        %s839 = sand.u32 %s306, 1
        %s840 = smul.addr %s839, 192
        %s841 = scalar_lea.vmem [#allocation8], %s840
        %p842 = pneg %p319
        %p843 = pneg %p316
        %s844 = sand.u32 %s47, 1
        %s845 = scalar_lea.sflag [#allocation9], %s844
        %s846 = sand.u32 %s332, 1
        %s847 = smul.addr %s846, 3
        %s848 = scalar_lea.vmem [#allocation10], %s847
        %p849 = pneg %p345
        %p850 = pneg %p342
        %s851 = sand.u32 %s47, 1
        %s852 = scalar_lea.sflag [#allocation12], %s851
        %s853 = sand.u32 %s358, 1
        %s854 = smul.addr %s853, 64
        %s855 = scalar_lea.vmem [#allocation11], %s854
        %p856 = pneg %p371
        %p857 = pneg %p368
        %p858 = scmp.lt.s32.totalorder %s47, 4
        %s859 = scalar_select %p858, %s47, 4
        %s860 = scalar_lea.vmem %s14, %s859
        %p861 = pneg %p397
        %p862 = pneg %p394
        %s863 = sand.u32 %s47, 1
        %s864 = scalar_lea.sflag [#allocation12], %s863
        %s865 = sand.u32 %s410, 1
        %s866 = smul.addr %s865, 64
        %s867 = scalar_lea.vmem [#allocation13], %s866
        %p868 = pneg %p423
        %p869 = pneg %p420
        %s870 = sand.u32 %s436, 1
        %s871 = scalar_lea.sflag [#allocation15], %s870
        %s872 = sand.u32 %s436, 1
        %s873 = scalar_lea.vmem [#allocation14], %s872
        %p874 = pneg %p449
        %p875 = pneg %p446
        %p876 = pneg %p470
        %p877 = pneg %p467
        %p878 = pneg %p491
        %p879 = pneg %p488
        %p880 = scmp.lt.s32.totalorder %s47, 4
        %s881 = scalar_select %p880, %s47, 4
        %s882 = scalar_lea.vmem %s10, %s881
        %p883 = scmp.lt.s32.totalorder %s47, 4
        %s884 = scalar_select %p883, %s47, 4
        %s885 = scalar_lea.vmem %s14, %s884
        %p886 = scmp.eq.s32.totalorder %s47, 0
        // Predicated region
        $region121: #{tpu_custom_call.1} parent=87 // pred_check
          %p887 = pneg %p886
        $region122: #{tpu_custom_call.1} parent=87 // pred_check_branch
          %889 = sbr.rel (%p887) target = $region124
        $region123: #{tpu_custom_call.1} parent=87 // pred_region
          %v890 = vld [vmem:[%s0] sm:$0xff]
          %v891 = vld [vmem:[%s0 + $0x8] sm:$0xff]
          %892 = vst [vmem:[#allocation16] sm:$0xff] %v890
          %893 = vst [vmem:[#allocation16 + $0x8] sm:$0xff] %v891
          %v894 = vld [vmem:[%s1] sm:$0xff]
          %v895 = vld [vmem:[%s1 + $0x8] sm:$0xff]
          %v896 = vld [vmem:[%s1 + $0x10] sm:$0xff]
          %v897 = vld [vmem:[%s1 + $0x18] sm:$0xff]
          %898 = vst [vmem:[#allocation17] sm:$0xff] %v894
          %899 = vst [vmem:[#allocation17 + $0x8] sm:$0xff] %v895
          %900 = vst [vmem:[#allocation17 + $0x10] sm:$0xff] %v896
          %901 = vst [vmem:[#allocation17 + $0x18] sm:$0xff] %v897
        $region124: #{tpu_custom_call.1} parent=87 // pred_fallthru
          _
        %v902 = vld [vmem:[#allocation16] sm:$0xff]
        %v903 = vld [vmem:[#allocation16 + $0x8] sm:$0xff]
        %v904 = vld [vmem:[#allocation17] sm:$0xff]
        %v905 = vld [vmem:[#allocation17 + $0x8] sm:$0xff]
        %v906 = vld [vmem:[#allocation17 + $0x10] sm:$0xff]
        %v907 = vld [vmem:[#allocation17 + $0x18] sm:$0xff]
        %v908 = vld [vmem:[%s2] sm:$0xff]
        %v909 = vld [vmem:[%s2 + $0x8] sm:$0xff]
        %v910 = vld [vmem:[%s2 + $0x10] sm:$0xff]
        %v911 = vld [vmem:[%s2 + $0x18] sm:$0xff]
        %vm912 = vcmask 130048
        %v914 = vsel %vm912, %v908, 0
        %v917 = vsel %vm912, %v909, 0
        %v920 = vsel %vm912, %v910, 0
        %v923 = vsel %vm912, %v911, 0
        %925 = vmatpush.msra.mxu0 0.0
        %926 = vmatpush.msra.mxu0 0.0
        %927 = vmatpush.msra.mxu0 0.0
        %928 = vmatpush.msra.mxu0 0.0
        %929 = vmatpush.msra.mxu0 0.0
        %930 = vmatpush.msra.mxu0 0.0
        %931 = vmatpush.msra.mxu0 0.0
        %932 = vmatpush.msra.mxu0 0.0
        %933 = vmatpush.msra.mxu0 0.0
        %934 = vmatpush.msra.mxu0 0.0
        %935 = vmatpush.msra.mxu0 0.0
        %936 = vmatpush.msra.mxu0 0.0
        %937 = vmatpush.msra.mxu0 0.0
        %938 = vmatpush.msra.mxu0 0.0
        %939 = vmatpush.msra.mxu0 %v903
        %940 = vmatpush.msra.mxu0 %v902
        %941 = vmatmul.f32.gmra.mxu0 %v914
        %v942 = vpop.f32.mrf.mxu0
        %v943 = vadd.f32 0.0, %v942
        %944 = vmatmul.f32.gmra.mxu0 %v917
        %v945 = vpop.f32.mrf.mxu0
        %v946 = vadd.f32 0.0, %v945
        %947 = vmatmul.f32.gmra.mxu0 %v920
        %v948 = vpop.f32.mrf.mxu0
        %v949 = vadd.f32 0.0, %v948
        %950 = vmatmul.f32.gmra.mxu0 %v923
        %v951 = vpop.f32.mrf.mxu0
        %v952 = vadd.f32 0.0, %v951
        %953 = vdwg.mxu0
        %v954 = vld [vmem:[%s3] sm:$0xff]
        %v955 = vld [vmem:[%s3 + $0x8] sm:$0xff]
        %v956 = vld [vmem:[%s3 + $0x10] sm:$0xff]
        %v957 = vld [vmem:[%s3 + $0x18] sm:$0xff]
        %v959 = vsel %vm912, %v954, 0
        %v962 = vsel %vm912, %v955, 0
        %v965 = vsel %vm912, %v956, 0
        %v968 = vsel %vm912, %v957, 0
        %970 = vmatpush.msra.mxu0 0.0
        %971 = vmatpush.msra.mxu0 0.0
        %972 = vmatpush.msra.mxu0 0.0
        %973 = vmatpush.msra.mxu0 0.0
        %974 = vmatpush.msra.mxu0 0.0
        %975 = vmatpush.msra.mxu0 0.0
        %976 = vmatpush.msra.mxu0 0.0
        %977 = vmatpush.msra.mxu0 0.0
        %978 = vmatpush.msra.mxu0 0.0
        %979 = vmatpush.msra.mxu0 0.0
        %980 = vmatpush.msra.mxu0 0.0
        %981 = vmatpush.msra.mxu0 0.0
        %982 = vmatpush.msra.mxu0 0.0
        %983 = vmatpush.msra.mxu0 0.0
        %984 = vmatpush.msra.mxu0 %v903
        %985 = vmatpush.msra.mxu0 %v902
        %986 = vmatmul.f32.gmra.mxu0 %v959
        %v987 = vpop.f32.mrf.mxu0
        %v988 = vadd.f32 0.0, %v987
        %989 = vmatmul.f32.gmra.mxu0 %v962
        %v990 = vpop.f32.mrf.mxu0
        %v991 = vadd.f32 0.0, %v990
        %992 = vmatmul.f32.gmra.mxu0 %v965
        %v993 = vpop.f32.mrf.mxu0
        %v994 = vadd.f32 0.0, %v993
        %995 = vmatmul.f32.gmra.mxu0 %v968
        %v996 = vpop.f32.mrf.mxu0
        %v997 = vadd.f32 0.0, %v996
        %998 = vdwg.mxu0
        %v999 = vpack.c.bf16 %v946, %v943
        %v1000 = vpack.c.bf16 %v952, %v949
        %v1001 = vld [vmem:[%s722] sm:$0xf]
        %v1002 = vld [vmem:[%s722 + $0x4] sm:$0xf]
        %v1003 = vld [vmem:[%s722 + $0x8] sm:$0xf]
        %v1004 = vld [vmem:[%s722 + $0xc] sm:$0xf]
        %v1005 = vld [vmem:[%s722 + $0x10] sm:$0xf]
        %v1006 = vld [vmem:[%s722 + $0x14] sm:$0xf]
        %v1007 = vld [vmem:[%s722 + $0x18] sm:$0xf]
        %v1008 = vld [vmem:[%s722 + $0x1c] sm:$0xf]
        %v1009 = vld [vmem:[%s722 + $0x20] sm:$0xf]
        %v1010 = vld [vmem:[%s722 + $0x24] sm:$0xf]
        %v1011 = vld [vmem:[%s722 + $0x28] sm:$0xf]
        %v1012 = vld [vmem:[%s722 + $0x2c] sm:$0xf]
        %v1013 = vld [vmem:[%s722 + $0x30] sm:$0xf]
        %v1014 = vld [vmem:[%s722 + $0x34] sm:$0xf]
        %v1015 = vld [vmem:[%s722 + $0x38] sm:$0xf]
        %v1016 = vld [vmem:[%s722 + $0x3c] sm:$0xf]
        %v1017 = vpack.c.bf16 %v905, %v904
        %v1018 = vpack.c.bf16 %v907, %v906
        %v1019 = vld [vmem:[%s732] sm:$0xf]
        %v1020 = vld [vmem:[%s732 + $0x4] sm:$0xf]
        %v1021 = vld [vmem:[%s732 + $0x8] sm:$0xf]
        %v1022 = vld [vmem:[%s732 + $0xc] sm:$0xf]
        %v1023 = vld [vmem:[%s732 + $0x10] sm:$0xf]
        %v1024 = vld [vmem:[%s732 + $0x14] sm:$0xf]
        %v1025 = vld [vmem:[%s732 + $0x18] sm:$0xf]
        %v1026 = vld [vmem:[%s732 + $0x1c] sm:$0xf]
        %v1027 = vld [vmem:[%s732 + $0x20] sm:$0xf]
        %v1028 = vld [vmem:[%s732 + $0x24] sm:$0xf]
        %v1029 = vld [vmem:[%s732 + $0x28] sm:$0xf]
        %v1030 = vld [vmem:[%s732 + $0x2c] sm:$0xf]
        %v1031 = vld [vmem:[%s732 + $0x30] sm:$0xf]
        %v1032 = vld [vmem:[%s732 + $0x34] sm:$0xf]
        %v1033 = vld [vmem:[%s732 + $0x38] sm:$0xf]
        %v1034 = vld [vmem:[%s732 + $0x3c] sm:$0xf]
        %v1051 = vunpack.c.l.b16 %v1019
        %v1052 = vunpack.c.l.b16 %v1020
        %v1053 = vunpack.c.l.b16 %v1021
        %v1054 = vunpack.c.l.b16 %v1022
        %v1055 = vunpack.c.l.b16 %v1023
        %v1056 = vunpack.c.l.b16 %v1024
        %v1057 = vunpack.c.l.b16 %v1025
        %v1058 = vunpack.c.l.b16 %v1026
        %v1059 = vunpack.c.l.b16 %v1027
        %v1060 = vunpack.c.l.b16 %v1028
        %v1061 = vunpack.c.l.b16 %v1029
        %v1062 = vunpack.c.l.b16 %v1030
        %v1063 = vunpack.c.l.b16 %v1031
        %v1064 = vunpack.c.l.b16 %v1032
        %v1065 = vunpack.c.l.b16 %v1033
        %v1066 = vunpack.c.l.b16 %v1034
        %v1067 = vpack.c.b16 %v1052, %v1051
        %v1068 = vpack.c.b16 %v1054, %v1053
        %v1069 = vpack.c.b16 %v1056, %v1055
        %v1070 = vpack.c.b16 %v1058, %v1057
        %v1071 = vpack.c.b16 %v1060, %v1059
        %v1072 = vpack.c.b16 %v1062, %v1061
        %v1073 = vpack.c.b16 %v1064, %v1063
        %v1074 = vpack.c.b16 %v1066, %v1065
        %1083 = vmatpush.bf16.msra.mxu0 %v1074
        %1084 = vmatpush.bf16.msra.mxu0 %v1073
        %1085 = vmatpush.bf16.msra.mxu0 %v1072
        %1086 = vmatpush.bf16.msra.mxu0 %v1071
        %1087 = vmatpush.bf16.msra.mxu0 %v1070
        %1088 = vmatpush.bf16.msra.mxu0 %v1069
        %1089 = vmatpush.bf16.msra.mxu0 %v1068
        %1090 = vmatpush.bf16.msra.mxu0 %v1067
        %1091 = vmatmul.bf16.gmra.mxu0 %v1017
        %v1092 = vpop.f32.mrf.mxu0
        %v1093 = vadd.f32 0.0, %v1092
        %v1094 = vpop.f32.mrf.mxu0
        %v1095 = vadd.f32 0.0, %v1094
        %1096 = vmatmul.bf16.gmra.mxu0 %v1018
        %v1097 = vpop.f32.mrf.mxu0
        %v1098 = vadd.f32 0.0, %v1097
        %v1099 = vpop.f32.mrf.mxu0
        %v1100 = vadd.f32 0.0, %v1099
        %1101 = vdwg.mxu0
        %v1118 = vunpack.c.l.b16 %v1001
        %v1119 = vunpack.c.l.b16 %v1002
        %v1120 = vunpack.c.l.b16 %v1003
        %v1121 = vunpack.c.l.b16 %v1004
        %v1122 = vunpack.c.l.b16 %v1005
        %v1123 = vunpack.c.l.b16 %v1006
        %v1124 = vunpack.c.l.b16 %v1007
        %v1125 = vunpack.c.l.b16 %v1008
        %v1126 = vunpack.c.l.b16 %v1009
        %v1127 = vunpack.c.l.b16 %v1010
        %v1128 = vunpack.c.l.b16 %v1011
        %v1129 = vunpack.c.l.b16 %v1012
        %v1130 = vunpack.c.l.b16 %v1013
        %v1131 = vunpack.c.l.b16 %v1014
        %v1132 = vunpack.c.l.b16 %v1015
        %v1133 = vunpack.c.l.b16 %v1016
        %v1134 = vpack.c.b16 %v1119, %v1118
        %v1135 = vpack.c.b16 %v1121, %v1120
        %v1136 = vpack.c.b16 %v1123, %v1122
        %v1137 = vpack.c.b16 %v1125, %v1124
        %v1138 = vpack.c.b16 %v1127, %v1126
        %v1139 = vpack.c.b16 %v1129, %v1128
        %v1140 = vpack.c.b16 %v1131, %v1130
        %v1141 = vpack.c.b16 %v1133, %v1132
        %1150 = vmatpush.bf16.msra.mxu0 %v1141
        %1151 = vmatpush.bf16.msra.mxu0 %v1140
        %1152 = vmatpush.bf16.msra.mxu0 %v1139
        %1153 = vmatpush.bf16.msra.mxu0 %v1138
        %1154 = vmatpush.bf16.msra.mxu0 %v1137
        %1155 = vmatpush.bf16.msra.mxu0 %v1136
        %1156 = vmatpush.bf16.msra.mxu0 %v1135
        %1157 = vmatpush.bf16.msra.mxu0 %v1134
        %1158 = vmatmul.bf16.gmra.mxu0 %v999
        %v1159 = vpop.f32.mrf.mxu0
        %v1160 = vadd.f32 %v1093, %v1159
        %v1161 = vpop.f32.mrf.mxu0
        %v1162 = vadd.f32 %v1095, %v1161
        %1163 = vmatmul.bf16.gmra.mxu0 %v1000
        %v1164 = vpop.f32.mrf.mxu0
        %v1165 = vadd.f32 %v1098, %v1164
        %v1166 = vpop.f32.mrf.mxu0
        %v1167 = vadd.f32 %v1100, %v1166
        %1168 = vdwg.mxu0
        %v1169 = vpack.c.bf16 %v991, %v988
        %v1170 = vpack.c.bf16 %v997, %v994
        %v1171 = vld [vmem:[%s742] sm:$0xf]
        %v1172 = vld [vmem:[%s742 + $0x4] sm:$0xf]
        %v1173 = vld [vmem:[%s742 + $0x8] sm:$0xf]
        %v1174 = vld [vmem:[%s742 + $0xc] sm:$0xf]
        %v1175 = vld [vmem:[%s742 + $0x10] sm:$0xf]
        %v1176 = vld [vmem:[%s742 + $0x14] sm:$0xf]
        %v1177 = vld [vmem:[%s742 + $0x18] sm:$0xf]
        %v1178 = vld [vmem:[%s742 + $0x1c] sm:$0xf]
        %v1179 = vld [vmem:[%s742 + $0x20] sm:$0xf]
        %v1180 = vld [vmem:[%s742 + $0x24] sm:$0xf]
        %v1181 = vld [vmem:[%s742 + $0x28] sm:$0xf]
        %v1182 = vld [vmem:[%s742 + $0x2c] sm:$0xf]
        %v1183 = vld [vmem:[%s742 + $0x30] sm:$0xf]
        %v1184 = vld [vmem:[%s742 + $0x34] sm:$0xf]
        %v1185 = vld [vmem:[%s742 + $0x38] sm:$0xf]
        %v1186 = vld [vmem:[%s742 + $0x3c] sm:$0xf]
        %v1203 = vunpack.c.l.b16 %v1171
        %v1204 = vunpack.c.l.b16 %v1172
        %v1205 = vunpack.c.l.b16 %v1173
        %v1206 = vunpack.c.l.b16 %v1174
        %v1207 = vunpack.c.l.b16 %v1175
        %v1208 = vunpack.c.l.b16 %v1176
        %v1209 = vunpack.c.l.b16 %v1177
        %v1210 = vunpack.c.l.b16 %v1178
        %v1211 = vunpack.c.l.b16 %v1179
        %v1212 = vunpack.c.l.b16 %v1180
        %v1213 = vunpack.c.l.b16 %v1181
        %v1214 = vunpack.c.l.b16 %v1182
        %v1215 = vunpack.c.l.b16 %v1183
        %v1216 = vunpack.c.l.b16 %v1184
        %v1217 = vunpack.c.l.b16 %v1185
        %v1218 = vunpack.c.l.b16 %v1186
        %v1219 = vpack.c.b16 %v1204, %v1203
        %v1220 = vpack.c.b16 %v1206, %v1205
        %v1221 = vpack.c.b16 %v1208, %v1207
        %v1222 = vpack.c.b16 %v1210, %v1209
        %v1223 = vpack.c.b16 %v1212, %v1211
        %v1224 = vpack.c.b16 %v1214, %v1213
        %v1225 = vpack.c.b16 %v1216, %v1215
        %v1226 = vpack.c.b16 %v1218, %v1217
        %1235 = vmatpush.bf16.msra.mxu0 %v1226
        %1236 = vmatpush.bf16.msra.mxu0 %v1225
        %1237 = vmatpush.bf16.msra.mxu0 %v1224
        %1238 = vmatpush.bf16.msra.mxu0 %v1223
        %1239 = vmatpush.bf16.msra.mxu0 %v1222
        %1240 = vmatpush.bf16.msra.mxu0 %v1221
        %1241 = vmatpush.bf16.msra.mxu0 %v1220
        %1242 = vmatpush.bf16.msra.mxu0 %v1219
        %1243 = vmatmul.bf16.gmra.mxu0 %v1169
        %v1244 = vpop.f32.mrf.mxu0
        %v1245 = vadd.f32 0.0, %v1244
        %v1246 = vpop.f32.mrf.mxu0
        %v1247 = vadd.f32 0.0, %v1246
        %1248 = vmatmul.bf16.gmra.mxu0 %v1170
        %v1249 = vpop.f32.mrf.mxu0
        %v1250 = vadd.f32 0.0, %v1249
        %v1251 = vpop.f32.mrf.mxu0
        %v1252 = vadd.f32 0.0, %v1251
        %1253 = vdwg.mxu0
        %v1254 = vadd.f32 %v1160, %v1245
        %v1255 = vadd.f32 %v1162, %v1247
        %v1256 = vadd.f32 %v1165, %v1250
        %v1257 = vadd.f32 %v1167, %v1252
        %v1258 = vld [vmem:[%s882] sm:$0x1]
        %v1260 = vperm.slane %v1258, 0
        %v1262 = vadd.f32 %v1254, %v1260
        %v1263 = vadd.f32 %v1255, %v1260
        %v1264 = vadd.f32 %v1256, %v1260
        %v1265 = vadd.f32 %v1257, %v1260
        %v1266 = vmax.f32 %v1262, 0.0
        %v1267 = vmax.f32 %v1263, 0.0
        %v1268 = vmax.f32 %v1264, 0.0
        %v1269 = vmax.f32 %v1265, 0.0
        %v1270 = vpack.c.bf16 %v1267, %v1266
        %v1271 = vpack.c.bf16 %v1269, %v1268
        %v1272 = vld [vmem:[%s752] sm:$0xff]
        %v1273 = vld [vmem:[%s752 + $0x8] sm:$0xf]
        %v1274 = vld [vmem:[%s752 + $0xc] sm:$0xff]
        %v1275 = vld [vmem:[%s752 + $0x14] sm:$0xf]
        %v1276 = vld [vmem:[%s752 + $0x18] sm:$0xff]
        %v1277 = vld [vmem:[%s752 + $0x20] sm:$0xf]
        %v1278 = vld [vmem:[%s752 + $0x24] sm:$0xff]
        %v1279 = vld [vmem:[%s752 + $0x2c] sm:$0xf]
        %v1280 = vld [vmem:[%s752 + $0x30] sm:$0xff]
        %v1281 = vld [vmem:[%s752 + $0x38] sm:$0xf]
        %v1282 = vld [vmem:[%s752 + $0x3c] sm:$0xff]
        %v1283 = vld [vmem:[%s752 + $0x44] sm:$0xf]
        %v1284 = vld [vmem:[%s752 + $0x48] sm:$0xff]
        %v1285 = vld [vmem:[%s752 + $0x50] sm:$0xf]
        %v1286 = vld [vmem:[%s752 + $0x54] sm:$0xff]
        %v1287 = vld [vmem:[%s752 + $0x5c] sm:$0xf]
        %v1288 = vld [vmem:[%s752 + $0x60] sm:$0xff]
        %v1289 = vld [vmem:[%s752 + $0x68] sm:$0xf]
        %v1290 = vld [vmem:[%s752 + $0x6c] sm:$0xff]
        %v1291 = vld [vmem:[%s752 + $0x74] sm:$0xf]
        %v1292 = vld [vmem:[%s752 + $0x78] sm:$0xff]
        %v1293 = vld [vmem:[%s752 + $0x80] sm:$0xf]
        %v1294 = vld [vmem:[%s752 + $0x84] sm:$0xff]
        %v1295 = vld [vmem:[%s752 + $0x8c] sm:$0xf]
        %v1296 = vld [vmem:[%s752 + $0x90] sm:$0xff]
        %v1297 = vld [vmem:[%s752 + $0x98] sm:$0xf]
        %v1298 = vld [vmem:[%s752 + $0x9c] sm:$0xff]
        %v1299 = vld [vmem:[%s752 + $0xa4] sm:$0xf]
        %v1300 = vld [vmem:[%s752 + $0xa8] sm:$0xff]
        %v1301 = vld [vmem:[%s752 + $0xb0] sm:$0xf]
        %v1302 = vld [vmem:[%s752 + $0xb4] sm:$0xff]
        %v1303 = vld [vmem:[%s752 + $0xbc] sm:$0xf]
        %v1304 = vld [vmem:[%s762] sm:$0x7]
        %v1306 = vperm.slane %v1304, 0
        %v1307 = vperm.slane %v1304, 1
        %v1308 = vperm.slane %v1304, 2
        %v1344 = vunpack.c.l.b16 %v1272
        %v1345 = vunpack.c.h.b16 %v1272
        %v1346 = vunpack.c.l.b16 %v1273
        %v1347 = vunpack.c.l.b16 %v1274
        %v1348 = vunpack.c.h.b16 %v1274
        %v1349 = vunpack.c.l.b16 %v1275
        %v1350 = vunpack.c.l.b16 %v1276
        %v1351 = vunpack.c.h.b16 %v1276
        %v1352 = vunpack.c.l.b16 %v1277
        %v1353 = vunpack.c.l.b16 %v1278
        %v1354 = vunpack.c.h.b16 %v1278
        %v1355 = vunpack.c.l.b16 %v1279
        %v1356 = vunpack.c.l.b16 %v1280
        %v1357 = vunpack.c.h.b16 %v1280
        %v1358 = vunpack.c.l.b16 %v1281
        %v1359 = vunpack.c.l.b16 %v1282
        %v1360 = vunpack.c.h.b16 %v1282
        %v1361 = vunpack.c.l.b16 %v1283
        %v1362 = vunpack.c.l.b16 %v1284
        %v1363 = vunpack.c.h.b16 %v1284
        %v1364 = vunpack.c.l.b16 %v1285
        %v1365 = vunpack.c.l.b16 %v1286
        %v1366 = vunpack.c.h.b16 %v1286
        %v1367 = vunpack.c.l.b16 %v1287
        %v1368 = vunpack.c.l.b16 %v1288
        %v1369 = vunpack.c.h.b16 %v1288
        %v1370 = vunpack.c.l.b16 %v1289
        %v1371 = vunpack.c.l.b16 %v1290
        %v1372 = vunpack.c.h.b16 %v1290
        %v1373 = vunpack.c.l.b16 %v1291
        %v1374 = vunpack.c.l.b16 %v1292
        %v1375 = vunpack.c.h.b16 %v1292
        %v1376 = vunpack.c.l.b16 %v1293
        %v1377 = vunpack.c.l.b16 %v1294
        %v1378 = vunpack.c.h.b16 %v1294
        %v1379 = vunpack.c.l.b16 %v1295
        %v1380 = vunpack.c.l.b16 %v1296
        %v1381 = vunpack.c.h.b16 %v1296
        %v1382 = vunpack.c.l.b16 %v1297
        %v1383 = vunpack.c.l.b16 %v1298
        %v1384 = vunpack.c.h.b16 %v1298
        %v1385 = vunpack.c.l.b16 %v1299
        %v1386 = vunpack.c.l.b16 %v1300
        %v1387 = vunpack.c.h.b16 %v1300
        %v1388 = vunpack.c.l.b16 %v1301
        %v1389 = vunpack.c.l.b16 %v1302
        %v1390 = vunpack.c.h.b16 %v1302
        %v1391 = vunpack.c.l.b16 %v1303
        %v1392 = vpack.c.b16 %v1347, %v1344
        %v1393 = vpack.c.b16 %v1348, %v1345
        %v1394 = vpack.c.b16 %v1349, %v1346
        %v1395 = vpack.c.b16 %v1353, %v1350
        %v1396 = vpack.c.b16 %v1354, %v1351
        %v1397 = vpack.c.b16 %v1355, %v1352
        %v1398 = vpack.c.b16 %v1359, %v1356
        %v1399 = vpack.c.b16 %v1360, %v1357
        %v1400 = vpack.c.b16 %v1361, %v1358
        %v1401 = vpack.c.b16 %v1365, %v1362
        %v1402 = vpack.c.b16 %v1366, %v1363
        %v1403 = vpack.c.b16 %v1367, %v1364
        %v1404 = vpack.c.b16 %v1371, %v1368
        %v1405 = vpack.c.b16 %v1372, %v1369
        %v1406 = vpack.c.b16 %v1373, %v1370
        %v1407 = vpack.c.b16 %v1377, %v1374
        %v1408 = vpack.c.b16 %v1378, %v1375
        %v1409 = vpack.c.b16 %v1379, %v1376
        %v1410 = vpack.c.b16 %v1383, %v1380
        %v1411 = vpack.c.b16 %v1384, %v1381
        %v1412 = vpack.c.b16 %v1385, %v1382
        %v1413 = vpack.c.b16 %v1389, %v1386
        %v1414 = vpack.c.b16 %v1390, %v1387
        %v1415 = vpack.c.b16 %v1391, %v1388
        %1440 = vmatpush.bf16.msra.mxu0 %v1413
        %1441 = vmatpush.bf16.msra.mxu0 %v1410
        %1442 = vmatpush.bf16.msra.mxu0 %v1407
        %1443 = vmatpush.bf16.msra.mxu0 %v1404
        %1444 = vmatpush.bf16.msra.mxu0 %v1401
        %1445 = vmatpush.bf16.msra.mxu0 %v1398
        %1446 = vmatpush.bf16.msra.mxu0 %v1395
        %1447 = vmatpush.bf16.msra.mxu0 %v1392
        %1448 = vmatmul.bf16.gmra.mxu0 %v1270
        %v1449 = vpop.f32.mrf.mxu0
        %v1450 = vadd.f32 %v1306, %v1449
        %v1451 = vpop.f32.mrf.mxu0
        %v1452 = vadd.f32 %v1306, %v1451
        %1453 = vmatmul.bf16.gmra.mxu0 %v1271
        %v1454 = vpop.f32.mrf.mxu0
        %v1455 = vadd.f32 %v1306, %v1454
        %v1456 = vpop.f32.mrf.mxu0
        %v1457 = vadd.f32 %v1306, %v1456
        %1458 = vdwg.mxu0
        %1459 = vmatpush.bf16.msra.mxu0 %v1414
        %1460 = vmatpush.bf16.msra.mxu0 %v1411
        %1461 = vmatpush.bf16.msra.mxu0 %v1408
        %1462 = vmatpush.bf16.msra.mxu0 %v1405
        %1463 = vmatpush.bf16.msra.mxu0 %v1402
        %1464 = vmatpush.bf16.msra.mxu0 %v1399
        %1465 = vmatpush.bf16.msra.mxu0 %v1396
        %1466 = vmatpush.bf16.msra.mxu0 %v1393
        %1467 = vmatmul.bf16.gmra.mxu0 %v1270
        %v1468 = vpop.f32.mrf.mxu0
        %v1469 = vadd.f32 %v1307, %v1468
        %v1470 = vpop.f32.mrf.mxu0
        %v1471 = vadd.f32 %v1307, %v1470
        %1472 = vmatmul.bf16.gmra.mxu0 %v1271
        %v1473 = vpop.f32.mrf.mxu0
        %v1474 = vadd.f32 %v1307, %v1473
        %v1475 = vpop.f32.mrf.mxu0
        %v1476 = vadd.f32 %v1307, %v1475
        %1477 = vdwg.mxu0
        %1478 = vmatpush.bf16.msra.mxu0 %v1415
        %1479 = vmatpush.bf16.msra.mxu0 %v1412
        %1480 = vmatpush.bf16.msra.mxu0 %v1409
        %1481 = vmatpush.bf16.msra.mxu0 %v1406
        %1482 = vmatpush.bf16.msra.mxu0 %v1403
        %1483 = vmatpush.bf16.msra.mxu0 %v1400
        %1484 = vmatpush.bf16.msra.mxu0 %v1397
        %1485 = vmatpush.bf16.msra.mxu0 %v1394
        %1486 = vmatmul.bf16.gmra.mxu0 %v1270
        %v1487 = vpop.f32.mrf.mxu0
        %v1488 = vadd.f32 %v1308, %v1487
        %v1489 = vpop.f32.mrf.mxu0
        %v1490 = vadd.f32 %v1308, %v1489
        %1491 = vmatmul.bf16.gmra.mxu0 %v1271
        %v1492 = vpop.f32.mrf.mxu0
        %v1493 = vadd.f32 %v1308, %v1492
        %v1494 = vpop.f32.mrf.mxu0
        %v1495 = vadd.f32 %v1308, %v1494
        %1496 = vdwg.mxu0
        %v1497 = vmax.f32 %v1450, 0.0
        %v1498 = vmax.f32 %v1469, 0.0
        %v1499 = vmax.f32 %v1488, 0.0
        %v1500 = vmax.f32 %v1452, 0.0
        %v1501 = vmax.f32 %v1471, 0.0
        %v1502 = vmax.f32 %v1490, 0.0
        %v1503 = vmax.f32 %v1455, 0.0
        %v1504 = vmax.f32 %v1474, 0.0
        %v1505 = vmax.f32 %v1493, 0.0
        %v1506 = vmax.f32 %v1457, 0.0
        %v1507 = vmax.f32 %v1476, 0.0
        %v1508 = vmax.f32 %v1495, 0.0
        %v1509 = vld [vmem:[%s4] sm:$0xff]
        %v1510 = vld [vmem:[%s4 + $0x8] sm:$0xff]
        %v1511 = vld [vmem:[%s5] sm:$0xff]
        %v1512 = vld [vmem:[%s5 + $0x8] sm:$0xff]
        %vm1513 = vcmask 261120
        %v1515 = vsel %vm1513, %v1511, 0
        %v1518 = vsel %vm1513, %v1512, 0
        %1520 = vmatpush.msra.mxu0 0.0
        %1521 = vmatpush.msra.mxu0 0.0
        %1522 = vmatpush.msra.mxu0 0.0
        %1523 = vmatpush.msra.mxu0 0.0
        %1524 = vmatpush.msra.mxu0 0.0
        %1525 = vmatpush.msra.mxu0 0.0
        %1526 = vmatpush.msra.mxu0 0.0
        %1527 = vmatpush.msra.mxu0 0.0
        %1528 = vmatpush.msra.mxu0 0.0
        %1529 = vmatpush.msra.mxu0 0.0
        %1530 = vmatpush.msra.mxu0 0.0
        %1531 = vmatpush.msra.mxu0 0.0
        %1532 = vmatpush.msra.mxu0 %v1508
        %1533 = vmatpush.msra.mxu0 %v1505
        %1534 = vmatpush.msra.mxu0 %v1502
        %1535 = vmatpush.msra.mxu0 %v1499
        %1536 = vmatmul.f32.gmra.mxu0 %v1515
        %v1537 = vpop.f32.mrf.mxu0
        %v1538 = vadd.f32 0.0, %v1537
        %1539 = vmatmul.f32.gmra.mxu0 %v1518
        %v1540 = vpop.f32.mrf.mxu0
        %v1541 = vadd.f32 0.0, %v1540
        %1542 = vdwg.mxu0
        %v1544 = vsel %vm1513, %v1509, 0
        %v1547 = vsel %vm1513, %v1510, 0
        %1549 = vmatpush.msra.mxu0 0.0
        %1550 = vmatpush.msra.mxu0 0.0
        %1551 = vmatpush.msra.mxu0 0.0
        %1552 = vmatpush.msra.mxu0 0.0
        %1553 = vmatpush.msra.mxu0 0.0
        %1554 = vmatpush.msra.mxu0 0.0
        %1555 = vmatpush.msra.mxu0 0.0
        %1556 = vmatpush.msra.mxu0 0.0
        %1557 = vmatpush.msra.mxu0 0.0
        %1558 = vmatpush.msra.mxu0 0.0
        %1559 = vmatpush.msra.mxu0 0.0
        %1560 = vmatpush.msra.mxu0 0.0
        %1561 = vmatpush.msra.mxu0 %v1506
        %1562 = vmatpush.msra.mxu0 %v1503
        %1563 = vmatpush.msra.mxu0 %v1500
        %1564 = vmatpush.msra.mxu0 %v1497
        %1565 = vmatmul.f32.gmra.mxu0 %v1544
        %v1566 = vpop.f32.mrf.mxu0
        %v1567 = vadd.f32 %v1538, %v1566
        %1568 = vmatmul.f32.gmra.mxu0 %v1547
        %v1569 = vpop.f32.mrf.mxu0
        %v1570 = vadd.f32 %v1541, %v1569
        %1571 = vdwg.mxu0
        %v1572 = vld [vmem:[%s6] sm:$0xff]
        %v1573 = vld [vmem:[%s6 + $0x8] sm:$0xff]
        %1575 = vset.pattern.permute.xlu0 0
        %1576 = vperm.xlu0 %1575, %v1572
        %v1577 = vpop.permute.xlu0 %1576
        %1580 = vset.pattern.permute.xlu0 0
        %1581 = vperm.xlu0 %1580, %v1573
        %v1582 = vpop.permute.xlu0 %1581
        %v1584 = vmul.f32 %v1567, %v1577
        %v1585 = vmul.f32 %v1570, %v1582
        %v1586 = vpack.c.bf16 %v1585, %v1584
        %v1587 = vld [vmem:[%s772] sm:$0xf]
        %v1588 = vld [vmem:[%s772 + $0x4] sm:$0xf]
        %v1589 = vld [vmem:[%s772 + $0x8] sm:$0xf]
        %v1590 = vld [vmem:[%s772 + $0xc] sm:$0xf]
        %v1591 = vld [vmem:[%s772 + $0x10] sm:$0xf]
        %v1592 = vld [vmem:[%s772 + $0x14] sm:$0xf]
        %v1593 = vld [vmem:[%s772 + $0x18] sm:$0xf]
        %v1594 = vld [vmem:[%s772 + $0x1c] sm:$0xf]
        %v1595 = vld [vmem:[%s772 + $0x20] sm:$0xf]
        %v1596 = vld [vmem:[%s772 + $0x24] sm:$0xf]
        %v1597 = vld [vmem:[%s772 + $0x28] sm:$0xf]
        %v1598 = vld [vmem:[%s772 + $0x2c] sm:$0xf]
        %v1599 = vld [vmem:[%s772 + $0x30] sm:$0xf]
        %v1600 = vld [vmem:[%s772 + $0x34] sm:$0xf]
        %v1601 = vld [vmem:[%s772 + $0x38] sm:$0xf]
        %v1602 = vld [vmem:[%s772 + $0x3c] sm:$0xf]
        %v1603 = vld [vmem:[%s885] sm:$0x1]
        %v1605 = vperm.slane %v1603, 0
        %v1623 = vunpack.c.l.b16 %v1587
        %v1624 = vunpack.c.l.b16 %v1588
        %v1625 = vunpack.c.l.b16 %v1589
        %v1626 = vunpack.c.l.b16 %v1590
        %v1627 = vunpack.c.l.b16 %v1591
        %v1628 = vunpack.c.l.b16 %v1592
        %v1629 = vunpack.c.l.b16 %v1593
        %v1630 = vunpack.c.l.b16 %v1594
        %v1631 = vunpack.c.l.b16 %v1595
        %v1632 = vunpack.c.l.b16 %v1596
        %v1633 = vunpack.c.l.b16 %v1597
        %v1634 = vunpack.c.l.b16 %v1598
        %v1635 = vunpack.c.l.b16 %v1599
        %v1636 = vunpack.c.l.b16 %v1600
        %v1637 = vunpack.c.l.b16 %v1601
        %v1638 = vunpack.c.l.b16 %v1602
        %v1639 = vpack.c.b16 %v1624, %v1623
        %v1640 = vpack.c.b16 %v1626, %v1625
        %v1641 = vpack.c.b16 %v1628, %v1627
        %v1642 = vpack.c.b16 %v1630, %v1629
        %v1643 = vpack.c.b16 %v1632, %v1631
        %v1644 = vpack.c.b16 %v1634, %v1633
        %v1645 = vpack.c.b16 %v1636, %v1635
        %v1646 = vpack.c.b16 %v1638, %v1637
        %1655 = vmatpush.bf16.msra.mxu0 %v1646
        %1656 = vmatpush.bf16.msra.mxu0 %v1645
        %1657 = vmatpush.bf16.msra.mxu0 %v1644
        %1658 = vmatpush.bf16.msra.mxu0 %v1643
        %1659 = vmatpush.bf16.msra.mxu0 %v1642
        %1660 = vmatpush.bf16.msra.mxu0 %v1641
        %1661 = vmatpush.bf16.msra.mxu0 %v1640
        %1662 = vmatpush.bf16.msra.mxu0 %v1639
        %1663 = vmatmul.bf16.gmra.mxu0 %v1586
        %v1664 = vpop.f32.mrf.mxu0
        %v1665 = vadd.f32 %v1605, %v1664
        %v1666 = vpop.f32.mrf.mxu0
        %v1667 = vadd.f32 %v1605, %v1666
        %1668 = vdwg.mxu0
        %v1669 = vmax.f32 %v1665, 0.0
        %v1670 = vmax.f32 %v1667, 0.0
        %v1671 = vpack.c.bf16 %v1670, %v1669
        %v1672 = vld [vmem:[%s782] sm:$0xf]
        %v1673 = vld [vmem:[%s782 + $0x4] sm:$0xf]
        %v1674 = vld [vmem:[%s782 + $0x8] sm:$0xf]
        %v1675 = vld [vmem:[%s782 + $0xc] sm:$0xf]
        %v1676 = vld [vmem:[%s782 + $0x10] sm:$0xf]
        %v1677 = vld [vmem:[%s782 + $0x14] sm:$0xf]
        %v1678 = vld [vmem:[%s782 + $0x18] sm:$0xf]
        %v1679 = vld [vmem:[%s782 + $0x1c] sm:$0xf]
        %v1680 = vld [vmem:[%s782 + $0x20] sm:$0xf]
        %v1681 = vld [vmem:[%s782 + $0x24] sm:$0xf]
        %v1682 = vld [vmem:[%s782 + $0x28] sm:$0xf]
        %v1683 = vld [vmem:[%s782 + $0x2c] sm:$0xf]
        %v1684 = vld [vmem:[%s782 + $0x30] sm:$0xf]
        %v1685 = vld [vmem:[%s782 + $0x34] sm:$0xf]
        %v1686 = vld [vmem:[%s782 + $0x38] sm:$0xf]
        %v1687 = vld [vmem:[%s782 + $0x3c] sm:$0xf]
        %v1688 = vld [vmem:[%s791] sm:$0x1]
        %v1690 = vperm.slane %v1688, 0
        %v1708 = vunpack.c.l.b16 %v1672
        %v1709 = vunpack.c.l.b16 %v1673
        %v1710 = vunpack.c.l.b16 %v1674
        %v1711 = vunpack.c.l.b16 %v1675
        %v1712 = vunpack.c.l.b16 %v1676
        %v1713 = vunpack.c.l.b16 %v1677
        %v1714 = vunpack.c.l.b16 %v1678
        %v1715 = vunpack.c.l.b16 %v1679
        %v1716 = vunpack.c.l.b16 %v1680
        %v1717 = vunpack.c.l.b16 %v1681
        %v1718 = vunpack.c.l.b16 %v1682
        %v1719 = vunpack.c.l.b16 %v1683
        %v1720 = vunpack.c.l.b16 %v1684
        %v1721 = vunpack.c.l.b16 %v1685
        %v1722 = vunpack.c.l.b16 %v1686
        %v1723 = vunpack.c.l.b16 %v1687
        %v1724 = vpack.c.b16 %v1709, %v1708
        %v1725 = vpack.c.b16 %v1711, %v1710
        %v1726 = vpack.c.b16 %v1713, %v1712
        %v1727 = vpack.c.b16 %v1715, %v1714
        %v1728 = vpack.c.b16 %v1717, %v1716
        %v1729 = vpack.c.b16 %v1719, %v1718
        %v1730 = vpack.c.b16 %v1721, %v1720
        %v1731 = vpack.c.b16 %v1723, %v1722
        %1740 = vmatpush.bf16.msra.mxu0 %v1731
        %1741 = vmatpush.bf16.msra.mxu0 %v1730
        %1742 = vmatpush.bf16.msra.mxu0 %v1729
        %1743 = vmatpush.bf16.msra.mxu0 %v1728
        %1744 = vmatpush.bf16.msra.mxu0 %v1727
        %1745 = vmatpush.bf16.msra.mxu0 %v1726
        %1746 = vmatpush.bf16.msra.mxu0 %v1725
        %1747 = vmatpush.bf16.msra.mxu0 %v1724
        %1748 = vmatmul.bf16.gmra.mxu0 %v1671
        %v1749 = vpop.f32.mrf.mxu0
        %v1750 = vadd.f32 %v1690, %v1749
        %v1751 = vpop.f32.mrf.mxu0
        %v1752 = vadd.f32 %v1690, %v1751
        %1753 = vdwg.mxu0
        %v1754 = vmax.f32 %v1750, 0.0
        %v1755 = vmax.f32 %v1752, 0.0
        %1756 = vst [vmem:[#allocation16] sm:$0xff] %v1754
        %1757 = vst [vmem:[#allocation16 + $0x8] sm:$0xff] %v1755
        %1758 = vst [vmem:[#allocation17] sm:$0xff] %v1498
        %1759 = vst [vmem:[#allocation17 + $0x8] sm:$0xff] %v1501
        %1760 = vst [vmem:[#allocation17 + $0x10] sm:$0xff] %v1504
        %1761 = vst [vmem:[#allocation17 + $0x18] sm:$0xff] %v1507
        // Predicated region
        $region125: #{tpu_custom_call.1} parent=87 // pred_check
          %p1762 = pneg %p467
        $region126: #{tpu_custom_call.1} parent=87 // pred_check_branch
          %1764 = sbr.rel (%p1762) target = $region128
        $region127: #{tpu_custom_call.1} parent=87 // pred_region
          %1766 = vsyncadd [#allocation4], 0
          %s1767 = sshll.u32 [#allocation16], 4
          %s1768 = int_to_ptr.vmem [resolvable:$true] %s1767
          %s1769 = sshll.u32 %s17, 4
          %s1770 = int_to_ptr.hbm [resolvable:$true] %s1769
          %1775 = dma.vmem_to_hbm [thread:$0]  %s1768, 256, %s1770, [#allocation4], 128, 128, 8
        $region128: #{tpu_custom_call.1} parent=87 // pred_fallthru
          _
        // Predicated region
        $region129: #{tpu_custom_call.1} parent=87 // pred_check
          %p1776 = pneg %p488
        $region130: #{tpu_custom_call.1} parent=87 // pred_check_branch
          %1778 = sbr.rel (%p1776) target = $region132
        $region131: #{tpu_custom_call.1} parent=87 // pred_region
          %1780 = vsyncadd [#allocation18], 0
          %s1781 = sshll.u32 [#allocation17], 4
          %s1782 = int_to_ptr.vmem [resolvable:$true] %s1781
          %s1783 = sshll.u32 %s18, 4
          %s1784 = int_to_ptr.hbm [resolvable:$true] %s1783
          %1789 = dma.vmem_to_hbm [thread:$0]  %s1782, 512, %s1784, [#allocation18], 128, 128, 8
        $region132: #{tpu_custom_call.1} parent=87 // pred_fallthru
          _
        // Predicated region
        $region133: #{tpu_custom_call.1} parent=87 // pred_check
          %p1790 = pneg %p467
        $region134: #{tpu_custom_call.1} parent=87 // pred_check_branch
          %1792 = sbr.rel (%p1790) target = $region136
        $region135: #{tpu_custom_call.1} parent=87 // pred_region
          %1794 = dma.done [#allocation4], 256
        $region136: #{tpu_custom_call.1} parent=87 // pred_fallthru
          _
        // Predicated region
        $region137: #{tpu_custom_call.1} parent=87 // pred_check
          %p1795 = pneg %p488
        $region138: #{tpu_custom_call.1} parent=87 // pred_check_branch
          %1797 = sbr.rel (%p1795) target = $region140
        $region139: #{tpu_custom_call.1} parent=87 // pred_region
          %1799 = dma.done [#allocation18], 512
        $region140: #{tpu_custom_call.1} parent=87 // pred_fallthru
          _
      $region88: #{tpu_custom_call.1} parent=5 // pred_fallthru
        _
      %p1800 = scmp.le.s32.totalorder 2, %s42
      // Predicated region
      $region141: #{tpu_custom_call.1} parent=5 // pred_check
        %p1801 = pneg %p1800
      $region142: #{tpu_custom_call.1} parent=5 // pred_check_branch
        %1803 = sbr.rel (%p1801) target = $region144
      $region143: #{tpu_custom_call.1} parent=5 // pred_region
        %s1804 = ssub.s32 %s42, 2
      $region144: #{tpu_custom_call.1} parent=5 // pred_fallthru
        _
    $region6: #{tpu_custom_call.1} parent=1 // loop_footer
      %s46 = sadd.s32 1, %s42
    $region7: #{tpu_custom_call.1} parent=1 // loop_footer_branch
      %41 = sbr.rel target = $region3
    $region8: #{tpu_custom_call.1} parent=1 // loop_exit
      _
    %1805 = vsyncpa [#allocation3], 1
    %s1806 = scalar_lea.sflag [#allocation3], 1
    %1807 = vsyncpa %s1806, 1
    %1808 = vsyncpa [#allocation6], 1
    %s1809 = scalar_lea.sflag [#allocation6], 1
    %1810 = vsyncpa %s1809, 1
    %1811 = vsyncpa [#allocation9], 1
    %s1812 = scalar_lea.sflag [#allocation9], 1
    %1813 = vsyncpa %s1812, 1
    %1814 = vsyncpa [#allocation12], 1
    %s1815 = scalar_lea.sflag [#allocation12], 1
    %1816 = vsyncpa %s1815, 1
    %1817 = vsyncpa [#allocation15], 1
    %s1818 = scalar_lea.sflag [#allocation15], 1
    %1819 = vsyncpa %s1818, 1
    %1820 = vsyncpa [#allocation4], 1
    %s1821 = scalar_lea.sflag [#allocation4], 1
    %1822 = vsyncpa %s1821, 1
    %1823 = vsyncpa [#allocation18], 1

</llo_original>
